<compile_context>
chip_gen: v5e
topology: v5e:2x2
jax: 0.10.0
libtpu: 0.0.40
codegen_flags: <defaults>
</compile_context>

<pallas_src>
import jax
import jax.numpy as jnp
import numpy as np
from jax.experimental import pallas as pl
from jax.experimental.pallas import tpu as pltpu


# Config used (same as previous version):
#   layer_dim_list = [(4, 8, 4, 2, 1), (8, 16, 4, 2, 1), (8, 16)]
LAYER_DIM_LIST = [(4, 8, 4, 2, 1), (8, 16, 4, 2, 1), (8, 16)]  # ..., (z_dim, view_size)
Z_DIM, VIEW_SIZE = LAYER_DIM_LIST[-1]


def _ksp(dims):
    k = dims[2]
    s = dims[3] if len(dims) > 3 else 1
    p = dims[4] if len(dims) > 4 else 0
    return k, s, p


def _conv_geom(h, w, k, s, p):
    return (h + 2 * p - k) // s + 1, (w + 2 * p - k) // s + 1


def _axis_indicators(n_in, n_out, k, s, p):
    """ind[t, xi, xo] = 1 iff xi == s*xo + t - p and 0 <= xi < n_in.

    All-zero rows/columns encode the conv zero padding along that axis.
    """
    ind = np.zeros((k, n_in, n_out), np.float32)
    for t in range(k):
        for xo in range(n_out):
            xi = s * xo + t - p
            if 0 <= xi < n_in:
                ind[t, xi, xo] = 1.0
    return ind


# ----------------------------------------------------------------------------
# Fused Pallas kernel: all convs + bias + ReLU + final 1x1 conv, per sample.
# Activation layout inside the kernel: [C*H, W] (W on lanes).
# Ref order: x, [B_l, Cg_l, bias_l] per conv layer, W_last, b_last, out.
# ----------------------------------------------------------------------------
def _make_fused_kernel(num_convs):
    def kernel(*refs):
        o_ref = refs[-1]
        act_bf = refs[0][0]                      # [C_in*H_in, W_in] bf16, this sample
        r = 1
        for _ in range(num_convs):
            b_ref, cg_ref, bias_ref = refs[r], refs[r + 1], refs[r + 2]
            r += 3
            rows = b_ref.shape[1]                # C_out * H_out
            w_out = cg_ref.shape[2]
            acc = jnp.zeros((rows, w_out), jnp.float32)
            for j in range(b_ref.shape[0]):      # k column taps (row taps folded)
                # Channel mix + row gather in one bf16 MXU matmul...
                t = jnp.dot(b_ref[j], act_bf, preferred_element_type=jnp.float32)
                # ...then the exact 0/1 column gather (kept f32, tiny matmul).
                acc = acc + jnp.dot(t, cg_ref[j], preferred_element_type=jnp.float32)
            # f32 epilogue (bias + ReLU): VPU math stays f32 (v5e-safe).
            act = jnp.maximum(acc + bias_ref[...], 0.0)
            act_bf = act.astype(jnp.bfloat16)
        # Final 1x1 conv (no activation): weights pre-expanded to [Cf*Hf, C*Hf].
        w_last_ref, b_last_ref = refs[r], refs[r + 1]
        out = jnp.dot(w_last_ref[...], act_bf, preferred_element_type=jnp.float32)
        o_ref[0] = (out + b_last_ref[...]).astype(o_ref.dtype)
    return kernel


# ----------------------------------------------------------------------------
# Builder: precompute static geometry + tiny column-gather constants, specs,
# and the jitted forward (weight repacking happens in the wrapper under jit).
# ----------------------------------------------------------------------------
def build_forward(layer_dim_list, input_shape):
    assert len(layer_dim_list) >= 2, 'insufficient layer dims'
    n, c_in, h, w = input_shape
    convs = layer_dim_list[:-1]
    z_dim, view_size = layer_dim_list[-1]
    c_f = 2 * z_dim

    # Static per-conv geometry + row/column indicator constants.
    conv_info = []                 # (k, ci, co, h_in, w_in, h_out, w_out)
    row_inds, col_inds = [], []
    c_cur, h_cur, w_cur = c_in, h, w
    for dims in convs:
        ci, co = dims[0], dims[1]
        assert ci == c_cur, 'channel chain mismatch in layer_dim_list'
        k, s, p = _ksp(dims)
        h_out, w_out = _conv_geom(h_cur, w_cur, k, s, p)
        row_inds.append(jnp.asarray(_axis_indicators(h_cur, h_out, k, s, p)))
        col_inds.append(jnp.asarray(_axis_indicators(w_cur, w_out, k, s, p)))
        conv_info.append((k, ci, co, h_cur, w_cur, h_out, w_out))
        c_cur, h_cur, w_cur = co, h_out, w_out
    assert c_cur == view_size, 'view_size must equal last conv output channels'
    hf, wf = h_cur, w_cur

    kernel = _make_fused_kernel(len(convs))

    # BlockSpecs: batch on the grid ("parallel"); everything else whole-array
    # with a constant index_map -> copied into VMEM once, revisited afterwards.
    in_specs = [pl.BlockSpec((1, c_in * h, w), lambda i: (i, 0, 0))]
    for (k, ci, co, h_in, w_in, h_out, w_out) in conv_info:
        in_specs += [
            pl.BlockSpec((k, co * h_out, ci * h_in), lambda i: (0, 0, 0)),
            pl.BlockSpec((k, w_in, w_out), lambda i: (0, 0, 0)),
            pl.BlockSpec((co * h_out, 1), lambda i: (0, 0)),
        ]
    in_specs += [
        pl.BlockSpec((c_f * hf, view_size * hf), lambda i: (0, 0)),
        pl.BlockSpec((c_f * hf, 1), lambda i: (0, 0)),
    ]
    out_spec = pl.BlockSpec((1, c_f * hf, wf), lambda i: (i, 0, 0))

    # Advisory cost estimate (lets XLA schedule around the custom call).
    flops = 0
    bytes_accessed = n * c_in * h * w * 2 + n * c_f * hf * wf * 4
    for (k, ci, co, h_in, w_in, h_out, w_out) in conv_info:
        flops += k * (2 * (co * h_out) * (ci * h_in) * w_in
                      + 2 * (co * h_out) * w_in * w_out)
        bytes_accessed += (k * (co * h_out) * (ci * h_in) * 2
                           + k * w_in * w_out * 4 + (co * h_out) * 4)
    flops += 2 * (c_f * hf) * (view_size * hf) * wf
    flops *= n
    bytes_accessed += (c_f * hf) * (view_size * hf) * 2 + (c_f * hf) * 4

    fused_call = pl.pallas_call(
        kernel,
        out_shape=jax.ShapeDtypeStruct((n, c_f * hf, wf), jnp.float32),
        grid=(n,),
        in_specs=in_specs,
        out_specs=out_spec,
        compiler_params=pltpu.CompilerParams(
            dimension_semantics=("parallel",),   # v7x: shard batch over TCs
            vmem_limit_bytes=32 * 1024 * 1024),  # explicit, plenty of headroom
        cost_estimate=pl.CostEstimate(
            flops=int(flops), transcendentals=0,
            bytes_accessed=int(bytes_accessed)),
    )

    @jax.jit
    def forward(params, x):
        # Only glue left outside the kernel: input reshape + bf16 cast and the
        # tiny weight repacks (row gather + kernel-row taps + channel mixing
        # folded into one matrix per layer).  All fused under this jit; no
        # im2col, no HBM-resident intermediates between layers.
        ops = [x.reshape(n, c_in * h, w).astype(jnp.bfloat16)]
        for li, (k, ci, co, h_in, w_in, h_out, w_out) in enumerate(conv_info):
            w_l, b_l = params[li]
            # B[j, (co,ho), (ci,hi)] = sum_i W[co,ci,i,j] * [hi == s*ho + i - p]
            b_mat = jnp.einsum('ocij,ihy->joych', w_l, row_inds[li])
            b_mat = b_mat.reshape(k, co * h_out, ci * h_in).astype(jnp.bfloat16)
            bias = jnp.broadcast_to(b_l[:, None], (co, h_out)).reshape(co * h_out, 1)
            ops += [b_mat, col_inds[li], bias]
        w_last, b_last = params[-1]
        w2 = w_last.reshape(c_f, view_size)
        wb = jnp.einsum('fc,hy->fhcy', w2, jnp.eye(hf, dtype=w2.dtype))
        wb = wb.reshape(c_f * hf, view_size * hf).astype(jnp.bfloat16)
        bb = jnp.broadcast_to(b_last[:, None], (c_f, hf)).reshape(c_f * hf, 1)
        ops += [wb, bb]

        out = fused_call(*ops)                   # [N, 2*z_dim*Hf, Wf]
        out = out.reshape(n, c_f, hf, wf)        # NCHW
        return out[:, :z_dim], out[:, z_dim:]

    return forward


# ----------------------------------------------------------------------------
# Parameter init (PyTorch-like Conv2d init, deterministic) + pure-JAX reference
# ----------------------------------------------------------------------------
def init_params(key):
    params = []
    for dim_tuple in LAYER_DIM_LIST[:-1]:
        c_in, c_out, k = dim_tuple[0], dim_tuple[1], dim_tuple[2]
        key, kw_, kb_ = jax.random.split(key, 3)
        fan_in = c_in * k * k
        bound = 1.0 / np.sqrt(fan_in)
        w = jax.random.uniform(kw_, (c_out, c_in, k, k), jnp.float32, -bound, bound)
        b = jax.random.uniform(kb_, (c_out,), jnp.float32, -bound, bound)
        params.append((w, b))
    key, kw_, kb_ = jax.random.split(key, 3)
    bound = 1.0 / np.sqrt(VIEW_SIZE)
    w = jax.random.uniform(kw_, (2 * Z_DIM, VIEW_SIZE, 1, 1), jnp.float32, -bound, bound)
    b = jax.random.uniform(kb_, (2 * Z_DIM,), jnp.float32, -bound, bound)
    params.append((w, b))
    return params


def conv_encoder_reference(params, x):
    def conv(h, w, b, s, p, relu):
        y = jax.lax.conv_general_dilated(
            h, w, window_strides=(s, s), padding=[(p, p), (p, p)],
            dimension_numbers=("NCHW", "OIHW", "NCHW"))
        y = y + b.reshape(1, -1, 1, 1)
        return jnp.maximum(y, 0.0) if relu else y

    h = x
    for li, dim_tuple in enumerate(LAYER_DIM_LIST[:-1]):
        k, s, p = _ksp(dim_tuple)
        w, b = params[li]
        h = conv(h, w, b, s, p, True)
    w, b = params[-1]
    h = conv(h, w, b, 1, 0, False)
    return h[:, :Z_DIM], h[:, Z_DIM:]


if __name__ == "__main__":
    key = jax.random.PRNGKey(0)
    key, kx = jax.random.split(key)
    x = jax.random.normal(kx, (2, 4, 16, 16), jnp.float32)   # NCHW, like PyTorch

    params = init_params(key)
    forward = build_forward(LAYER_DIM_LIST, x.shape)

    means, logvar = forward(params, x)
    jax.block_until_ready(means)
    jax.block_until_ready(logvar)

    ref_means, ref_logvar = conv_encoder_reference(params, x)
    assert means.shape == (2, Z_DIM, 4, 4) and logvar.shape == (2, Z_DIM, 4, 4)
    # bf16 MXU operands (f32 accumulation) -> slightly loose tolerance vs f32 ref.
    np.testing.assert_allclose(np.asarray(means), np.asarray(ref_means),
                               rtol=5e-2, atol=5e-2)
    np.testing.assert_allclose(np.asarray(logvar), np.asarray(ref_logvar),
                               rtol=5e-2, atol=5e-2)

    print("KERNEL_OK")
</pallas_src>

<mosaic_0001>
module attributes {stable_mosaic.version = 11 : i64} {
  func.func @kernel(%arg0: i32, %arg1: memref<1x64x16xbf16, #tpu.memory_space<vmem>>, %arg2: memref<4x64x64xbf16, #tpu.memory_space<vmem>>, %arg3: memref<4x16x8xf32, #tpu.memory_space<vmem>>, %arg4: memref<64x1xf32, #tpu.memory_space<vmem>>, %arg5: memref<4x64x64xbf16, #tpu.memory_space<vmem>>, %arg6: memref<4x8x4xf32, #tpu.memory_space<vmem>>, %arg7: memref<64x1xf32, #tpu.memory_space<vmem>>, %arg8: memref<64x64xbf16, #tpu.memory_space<vmem>>, %arg9: memref<64x1xf32, #tpu.memory_space<vmem>>, %arg10: memref<1x64x4xf32, #tpu.memory_space<vmem>>) attributes {dimension_semantics = [#tpu.dimension_semantics<parallel>], iteration_bounds = array<i64: 2>, scalar_prefetch = 0 : i64, scratch_operands = 0 : i64, tpu.core_type = #tpu.core_type<tc>, window_params = [{transform_indices = @transform_0, window_bounds = array<i64: 1, 64, 16>}, {pipeline_mode = #tpu.pipeline_mode<synchronous>, transform_indices = @transform_1, window_bounds = array<i64: 4, 64, 64>}, {pipeline_mode = #tpu.pipeline_mode<synchronous>, transform_indices = @transform_2, window_bounds = array<i64: 4, 16, 8>}, {pipeline_mode = #tpu.pipeline_mode<synchronous>, transform_indices = @transform_3, window_bounds = array<i64: 64, 1>}, {pipeline_mode = #tpu.pipeline_mode<synchronous>, transform_indices = @transform_4, window_bounds = array<i64: 4, 64, 64>}, {pipeline_mode = #tpu.pipeline_mode<synchronous>, transform_indices = @transform_5, window_bounds = array<i64: 4, 8, 4>}, {pipeline_mode = #tpu.pipeline_mode<synchronous>, transform_indices = @transform_6, window_bounds = array<i64: 64, 1>}, {pipeline_mode = #tpu.pipeline_mode<synchronous>, transform_indices = @transform_7, window_bounds = array<i64: 64, 64>}, {pipeline_mode = #tpu.pipeline_mode<synchronous>, transform_indices = @transform_8, window_bounds = array<i64: 64, 1>}, {transform_indices = @transform_9, window_bounds = array<i64: 1, 64, 4>}]} {
    %c0 = arith.constant 0 : index
    %c0_0 = arith.constant 0 : index
    %c0_1 = arith.constant 0 : index
    %0 = vector.load %arg1[%c0, %c0_0, %c0_1] : memref<1x64x16xbf16, #tpu.memory_space<vmem>>, vector<1x64x16xbf16>
    %1 = vector.shape_cast %0 : vector<1x64x16xbf16> to vector<64x16xbf16>
    %cst = arith.constant 0.000000e+00 : f32
    %2 = vector.broadcast %cst : f32 to vector<64x8xf32>
    %c0_2 = arith.constant 0 : index
    %c0_3 = arith.constant 0 : index
    %c0_4 = arith.constant 0 : index
    %3 = vector.load %arg2[%c0_2, %c0_3, %c0_4] : memref<4x64x64xbf16, #tpu.memory_space<vmem>>, vector<1x64x64xbf16>
    %4 = vector.shape_cast %3 : vector<1x64x64xbf16> to vector<64x64xbf16>
    %cst_5 = arith.constant dense<0.000000e+00> : vector<64x16xf32>
    %5 = tpu.matmul %4, %1, %cst_5 {dimension_numbers = #tpu.dot_dimension_numbers<[1], [0], [0], [1], [0, 0, 1, 1], [], []>} : vector<64x64xbf16>, vector<64x16xbf16>, vector<64x16xf32> -> vector<64x16xf32>
    %c0_6 = arith.constant 0 : index
    %c0_7 = arith.constant 0 : index
    %c0_8 = arith.constant 0 : index
    %6 = vector.load %arg3[%c0_6, %c0_7, %c0_8] : memref<4x16x8xf32, #tpu.memory_space<vmem>>, vector<1x16x8xf32>
    %7 = vector.shape_cast %6 : vector<1x16x8xf32> to vector<16x8xf32>
    %cst_9 = arith.constant dense<0.000000e+00> : vector<64x8xf32>
    %8 = tpu.matmul %5, %7, %cst_9 {dimension_numbers = #tpu.dot_dimension_numbers<[1], [0], [0], [1], [0, 0, 1, 1], [], []>} : vector<64x16xf32>, vector<16x8xf32>, vector<64x8xf32> -> vector<64x8xf32>
    %9 = arith.addf %2, %8 : vector<64x8xf32>
    %c1 = arith.constant 1 : index
    %c0_10 = arith.constant 0 : index
    %c0_11 = arith.constant 0 : index
    %10 = vector.load %arg2[%c1, %c0_10, %c0_11] : memref<4x64x64xbf16, #tpu.memory_space<vmem>>, vector<1x64x64xbf16>
    %11 = vector.shape_cast %10 : vector<1x64x64xbf16> to vector<64x64xbf16>
    %cst_12 = arith.constant dense<0.000000e+00> : vector<64x16xf32>
    %12 = tpu.matmul %11, %1, %cst_12 {dimension_numbers = #tpu.dot_dimension_numbers<[1], [0], [0], [1], [0, 0, 1, 1], [], []>} : vector<64x64xbf16>, vector<64x16xbf16>, vector<64x16xf32> -> vector<64x16xf32>
    %c1_13 = arith.constant 1 : index
    %c0_14 = arith.constant 0 : index
    %c0_15 = arith.constant 0 : index
    %13 = vector.load %arg3[%c1_13, %c0_14, %c0_15] : memref<4x16x8xf32, #tpu.memory_space<vmem>>, vector<1x16x8xf32>
    %14 = vector.shape_cast %13 : vector<1x16x8xf32> to vector<16x8xf32>
    %cst_16 = arith.constant dense<0.000000e+00> : vector<64x8xf32>
    %15 = tpu.matmul %12, %14, %cst_16 {dimension_numbers = #tpu.dot_dimension_numbers<[1], [0], [0], [1], [0, 0, 1, 1], [], []>} : vector<64x16xf32>, vector<16x8xf32>, vector<64x8xf32> -> vector<64x8xf32>
    %16 = arith.addf %9, %15 : vector<64x8xf32>
    %c2 = arith.constant 2 : index
    %c0_17 = arith.constant 0 : index
    %c0_18 = arith.constant 0 : index
    %17 = vector.load %arg2[%c2, %c0_17, %c0_18] : memref<4x64x64xbf16, #tpu.memory_space<vmem>>, vector<1x64x64xbf16>
    %18 = vector.shape_cast %17 : vector<1x64x64xbf16> to vector<64x64xbf16>
    %cst_19 = arith.constant dense<0.000000e+00> : vector<64x16xf32>
    %19 = tpu.matmul %18, %1, %cst_19 {dimension_numbers = #tpu.dot_dimension_numbers<[1], [0], [0], [1], [0, 0, 1, 1], [], []>} : vector<64x64xbf16>, vector<64x16xbf16>, vector<64x16xf32> -> vector<64x16xf32>
    %c2_20 = arith.constant 2 : index
    %c0_21 = arith.constant 0 : index
    %c0_22 = arith.constant 0 : index
    %20 = vector.load %arg3[%c2_20, %c0_21, %c0_22] : memref<4x16x8xf32, #tpu.memory_space<vmem>>, vector<1x16x8xf32>
    %21 = vector.shape_cast %20 : vector<1x16x8xf32> to vector<16x8xf32>
    %cst_23 = arith.constant dense<0.000000e+00> : vector<64x8xf32>
    %22 = tpu.matmul %19, %21, %cst_23 {dimension_numbers = #tpu.dot_dimension_numbers<[1], [0], [0], [1], [0, 0, 1, 1], [], []>} : vector<64x16xf32>, vector<16x8xf32>, vector<64x8xf32> -> vector<64x8xf32>
    %23 = arith.addf %16, %22 : vector<64x8xf32>
    %c3 = arith.constant 3 : index
    %c0_24 = arith.constant 0 : index
    %c0_25 = arith.constant 0 : index
    %24 = vector.load %arg2[%c3, %c0_24, %c0_25] : memref<4x64x64xbf16, #tpu.memory_space<vmem>>, vector<1x64x64xbf16>
    %25 = vector.shape_cast %24 : vector<1x64x64xbf16> to vector<64x64xbf16>
    %cst_26 = arith.constant dense<0.000000e+00> : vector<64x16xf32>
    %26 = tpu.matmul %25, %1, %cst_26 {dimension_numbers = #tpu.dot_dimension_numbers<[1], [0], [0], [1], [0, 0, 1, 1], [], []>} : vector<64x64xbf16>, vector<64x16xbf16>, vector<64x16xf32> -> vector<64x16xf32>
    %c3_27 = arith.constant 3 : index
    %c0_28 = arith.constant 0 : index
    %c0_29 = arith.constant 0 : index
    %27 = vector.load %arg3[%c3_27, %c0_28, %c0_29] : memref<4x16x8xf32, #tpu.memory_space<vmem>>, vector<1x16x8xf32>
    %28 = vector.shape_cast %27 : vector<1x16x8xf32> to vector<16x8xf32>
    %cst_30 = arith.constant dense<0.000000e+00> : vector<64x8xf32>
    %29 = tpu.matmul %26, %28, %cst_30 {dimension_numbers = #tpu.dot_dimension_numbers<[1], [0], [0], [1], [0, 0, 1, 1], [], []>} : vector<64x16xf32>, vector<16x8xf32>, vector<64x8xf32> -> vector<64x8xf32>
    %30 = arith.addf %23, %29 : vector<64x8xf32>
    %c0_31 = arith.constant 0 : index
    %c0_32 = arith.constant 0 : index
    %31 = vector.load %arg4[%c0_31, %c0_32] : memref<64x1xf32, #tpu.memory_space<vmem>>, vector<64x1xf32>
    %32 = vector.broadcast %31 : vector<64x1xf32> to vector<64x8xf32>
    %33 = arith.addf %30, %32 : vector<64x8xf32>
    %cst_33 = arith.constant 0.000000e+00 : f32
    %34 = vector.broadcast %cst_33 : f32 to vector<64x8xf32>
    %35 = arith.maximumf %33, %34 : vector<64x8xf32>
    %36 = arith.truncf %35 : vector<64x8xf32> to vector<64x8xbf16>
    %cst_34 = arith.constant 0.000000e+00 : f32
    %37 = vector.broadcast %cst_34 : f32 to vector<64x4xf32>
    %c0_35 = arith.constant 0 : index
    %c0_36 = arith.constant 0 : index
    %c0_37 = arith.constant 0 : index
    %38 = vector.load %arg5[%c0_35, %c0_36, %c0_37] : memref<4x64x64xbf16, #tpu.memory_space<vmem>>, vector<1x64x64xbf16>
    %39 = vector.shape_cast %38 : vector<1x64x64xbf16> to vector<64x64xbf16>
    %cst_38 = arith.constant dense<0.000000e+00> : vector<64x8xf32>
    %40 = tpu.matmul %39, %36, %cst_38 {dimension_numbers = #tpu.dot_dimension_numbers<[1], [0], [0], [1], [0, 0, 1, 1], [], []>} : vector<64x64xbf16>, vector<64x8xbf16>, vector<64x8xf32> -> vector<64x8xf32>
    %c0_39 = arith.constant 0 : index
    %c0_40 = arith.constant 0 : index
    %c0_41 = arith.constant 0 : index
    %41 = vector.load %arg6[%c0_39, %c0_40, %c0_41] : memref<4x8x4xf32, #tpu.memory_space<vmem>>, vector<1x8x4xf32>
    %42 = vector.shape_cast %41 : vector<1x8x4xf32> to vector<8x4xf32>
    %cst_42 = arith.constant dense<0.000000e+00> : vector<64x4xf32>
    %43 = tpu.matmul %40, %42, %cst_42 {dimension_numbers = #tpu.dot_dimension_numbers<[1], [0], [0], [1], [0, 0, 1, 1], [], []>} : vector<64x8xf32>, vector<8x4xf32>, vector<64x4xf32> -> vector<64x4xf32>
    %44 = arith.addf %37, %43 : vector<64x4xf32>
    %c1_43 = arith.constant 1 : index
    %c0_44 = arith.constant 0 : index
    %c0_45 = arith.constant 0 : index
    %45 = vector.load %arg5[%c1_43, %c0_44, %c0_45] : memref<4x64x64xbf16, #tpu.memory_space<vmem>>, vector<1x64x64xbf16>
    %46 = vector.shape_cast %45 : vector<1x64x64xbf16> to vector<64x64xbf16>
    %cst_46 = arith.constant dense<0.000000e+00> : vector<64x8xf32>
    %47 = tpu.matmul %46, %36, %cst_46 {dimension_numbers = #tpu.dot_dimension_numbers<[1], [0], [0], [1], [0, 0, 1, 1], [], []>} : vector<64x64xbf16>, vector<64x8xbf16>, vector<64x8xf32> -> vector<64x8xf32>
    %c1_47 = arith.constant 1 : index
    %c0_48 = arith.constant 0 : index
    %c0_49 = arith.constant 0 : index
    %48 = vector.load %arg6[%c1_47, %c0_48, %c0_49] : memref<4x8x4xf32, #tpu.memory_space<vmem>>, vector<1x8x4xf32>
    %49 = vector.shape_cast %48 : vector<1x8x4xf32> to vector<8x4xf32>
    %cst_50 = arith.constant dense<0.000000e+00> : vector<64x4xf32>
    %50 = tpu.matmul %47, %49, %cst_50 {dimension_numbers = #tpu.dot_dimension_numbers<[1], [0], [0], [1], [0, 0, 1, 1], [], []>} : vector<64x8xf32>, vector<8x4xf32>, vector<64x4xf32> -> vector<64x4xf32>
    %51 = arith.addf %44, %50 : vector<64x4xf32>
    %c2_51 = arith.constant 2 : index
    %c0_52 = arith.constant 0 : index
    %c0_53 = arith.constant 0 : index
    %52 = vector.load %arg5[%c2_51, %c0_52, %c0_53] : memref<4x64x64xbf16, #tpu.memory_space<vmem>>, vector<1x64x64xbf16>
    %53 = vector.shape_cast %52 : vector<1x64x64xbf16> to vector<64x64xbf16>
    %cst_54 = arith.constant dense<0.000000e+00> : vector<64x8xf32>
    %54 = tpu.matmul %53, %36, %cst_54 {dimension_numbers = #tpu.dot_dimension_numbers<[1], [0], [0], [1], [0, 0, 1, 1], [], []>} : vector<64x64xbf16>, vector<64x8xbf16>, vector<64x8xf32> -> vector<64x8xf32>
    %c2_55 = arith.constant 2 : index
    %c0_56 = arith.constant 0 : index
    %c0_57 = arith.constant 0 : index
    %55 = vector.load %arg6[%c2_55, %c0_56, %c0_57] : memref<4x8x4xf32, #tpu.memory_space<vmem>>, vector<1x8x4xf32>
    %56 = vector.shape_cast %55 : vector<1x8x4xf32> to vector<8x4xf32>
    %cst_58 = arith.constant dense<0.000000e+00> : vector<64x4xf32>
    %57 = tpu.matmul %54, %56, %cst_58 {dimension_numbers = #tpu.dot_dimension_numbers<[1], [0], [0], [1], [0, 0, 1, 1], [], []>} : vector<64x8xf32>, vector<8x4xf32>, vector<64x4xf32> -> vector<64x4xf32>
    %58 = arith.addf %51, %57 : vector<64x4xf32>
    %c3_59 = arith.constant 3 : index
    %c0_60 = arith.constant 0 : index
    %c0_61 = arith.constant 0 : index
    %59 = vector.load %arg5[%c3_59, %c0_60, %c0_61] : memref<4x64x64xbf16, #tpu.memory_space<vmem>>, vector<1x64x64xbf16>
    %60 = vector.shape_cast %59 : vector<1x64x64xbf16> to vector<64x64xbf16>
    %cst_62 = arith.constant dense<0.000000e+00> : vector<64x8xf32>
    %61 = tpu.matmul %60, %36, %cst_62 {dimension_numbers = #tpu.dot_dimension_numbers<[1], [0], [0], [1], [0, 0, 1, 1], [], []>} : vector<64x64xbf16>, vector<64x8xbf16>, vector<64x8xf32> -> vector<64x8xf32>
    %c3_63 = arith.constant 3 : index
    %c0_64 = arith.constant 0 : index
    %c0_65 = arith.constant 0 : index
    %62 = vector.load %arg6[%c3_63, %c0_64, %c0_65] : memref<4x8x4xf32, #tpu.memory_space<vmem>>, vector<1x8x4xf32>
    %63 = vector.shape_cast %62 : vector<1x8x4xf32> to vector<8x4xf32>
    %cst_66 = arith.constant dense<0.000000e+00> : vector<64x4xf32>
    %64 = tpu.matmul %61, %63, %cst_66 {dimension_numbers = #tpu.dot_dimension_numbers<[1], [0], [0], [1], [0, 0, 1, 1], [], []>} : vector<64x8xf32>, vector<8x4xf32>, vector<64x4xf32> -> vector<64x4xf32>
    %65 = arith.addf %58, %64 : vector<64x4xf32>
    %c0_67 = arith.constant 0 : index
    %c0_68 = arith.constant 0 : index
    %66 = vector.load %arg7[%c0_67, %c0_68] : memref<64x1xf32, #tpu.memory_space<vmem>>, vector<64x1xf32>
    %67 = vector.broadcast %66 : vector<64x1xf32> to vector<64x4xf32>
    %68 = arith.addf %65, %67 : vector<64x4xf32>
    %cst_69 = arith.constant 0.000000e+00 : f32
    %69 = vector.broadcast %cst_69 : f32 to vector<64x4xf32>
    %70 = arith.maximumf %68, %69 : vector<64x4xf32>
    %71 = arith.truncf %70 : vector<64x4xf32> to vector<64x4xbf16>
    %c0_70 = arith.constant 0 : index
    %c0_71 = arith.constant 0 : index
    %72 = vector.load %arg8[%c0_70, %c0_71] : memref<64x64xbf16, #tpu.memory_space<vmem>>, vector<64x64xbf16>
    %cst_72 = arith.constant dense<0.000000e+00> : vector<64x4xf32>
    %73 = tpu.matmul %72, %71, %cst_72 {dimension_numbers = #tpu.dot_dimension_numbers<[1], [0], [0], [1], [0, 0, 1, 1], [], []>} : vector<64x64xbf16>, vector<64x4xbf16>, vector<64x4xf32> -> vector<64x4xf32>
    %c0_73 = arith.constant 0 : index
    %c0_74 = arith.constant 0 : index
    %74 = vector.load %arg9[%c0_73, %c0_74] : memref<64x1xf32, #tpu.memory_space<vmem>>, vector<64x1xf32>
    %75 = vector.broadcast %74 : vector<64x1xf32> to vector<64x4xf32>
    %76 = arith.addf %73, %75 : vector<64x4xf32>
    %c0_75 = arith.constant 0 : index
    %c0_76 = arith.constant 0 : index
    %c0_77 = arith.constant 0 : index
    %77 = vector.load %arg10[%c0_75, %c0_76, %c0_77] : memref<1x64x4xf32, #tpu.memory_space<vmem>>, vector<1x64x4xf32>
    %78 = vector.shape_cast %77 : vector<1x64x4xf32> to vector<64x4xf32>
    %79 = vector.shape_cast %76 : vector<64x4xf32> to vector<1x64x4xf32>
    tpu.vector_store %arg10[%c0_75, %c0_76, %c0_77], %79 {strides = array<i32>} : memref<1x64x4xf32, #tpu.memory_space<vmem>>, vector<1x64x4xf32>,
    return
  }
  func.func @transform_0(%arg0: i32) -> (i32, i32, i32) {
    %c0_i32 = arith.constant 0 : i32
    %c0_i32_0 = arith.constant 0 : i32
    %c0_i32_1 = arith.constant 0 : i32
    return %arg0, %c0_i32, %c0_i32_0 : i32, i32, i32
  }
  func.func @transform_1(%arg0: i32) -> (i32, i32, i32) {
    %c0_i32 = arith.constant 0 : i32
    %c0_i32_0 = arith.constant 0 : i32
    %c0_i32_1 = arith.constant 0 : i32
    %c0_i32_2 = arith.constant 0 : i32
    return %c0_i32, %c0_i32_0, %c0_i32_1 : i32, i32, i32
  }
  func.func @transform_2(%arg0: i32) -> (i32, i32, i32) {
    %c0_i32 = arith.constant 0 : i32
    %c0_i32_0 = arith.constant 0 : i32
    %c0_i32_1 = arith.constant 0 : i32
    %c0_i32_2 = arith.constant 0 : i32
    return %c0_i32, %c0_i32_0, %c0_i32_1 : i32, i32, i32
  }
  func.func @transform_3(%arg0: i32) -> (i32, i32) {
    %c0_i32 = arith.constant 0 : i32
    %c0_i32_0 = arith.constant 0 : i32
    %c0_i32_1 = arith.constant 0 : i32
    return %c0_i32, %c0_i32_0 : i32, i32
  }
  func.func @transform_4(%arg0: i32) -> (i32, i32, i32) {
    %c0_i32 = arith.constant 0 : i32
    %c0_i32_0 = arith.constant 0 : i32
    %c0_i32_1 = arith.constant 0 : i32
    %c0_i32_2 = arith.constant 0 : i32
    return %c0_i32, %c0_i32_0, %c0_i32_1 : i32, i32, i32
  }
  func.func @transform_5(%arg0: i32) -> (i32, i32, i32) {
    %c0_i32 = arith.constant 0 : i32
    %c0_i32_0 = arith.constant 0 : i32
    %c0_i32_1 = arith.constant 0 : i32
    %c0_i32_2 = arith.constant 0 : i32
    return %c0_i32, %c0_i32_0, %c0_i32_1 : i32, i32, i32
  }
  func.func @transform_6(%arg0: i32) -> (i32, i32) {
    %c0_i32 = arith.constant 0 : i32
    %c0_i32_0 = arith.constant 0 : i32
    %c0_i32_1 = arith.constant 0 : i32
    return %c0_i32, %c0_i32_0 : i32, i32
  }
  func.func @transform_7(%arg0: i32) -> (i32, i32) {
    %c0_i32 = arith.constant 0 : i32
    %c0_i32_0 = arith.constant 0 : i32
    %c0_i32_1 = arith.constant 0 : i32
    return %c0_i32, %c0_i32_0 : i32, i32
  }
  func.func @transform_8(%arg0: i32) -> (i32, i32) {
    %c0_i32 = arith.constant 0 : i32
    %c0_i32_0 = arith.constant 0 : i32
    %c0_i32_1 = arith.constant 0 : i32
    return %c0_i32, %c0_i32_0 : i32, i32
  }
  func.func @transform_9(%arg0: i32) -> (i32, i32, i32) {
    %c0_i32 = arith.constant 0 : i32
    %c0_i32_0 = arith.constant 0 : i32
    %c0_i32_1 = arith.constant 0 : i32
    return %arg0, %c0_i32, %c0_i32_0 : i32, i32, i32
  }
}

</mosaic_0001>

<llo_original>
// kernel: forward.1
$region0: #{forward.1}
  #allocation0 [shape = 'u32[]', space=smem, size = 0x4, offset = 0x4, fixed_abs, tag = 'smem constant byte address 0x4 - core index']
  #allocation1 [shape = 'u32[72,128]{1,0:T(1,128)}', space=vmem, size = 0x9000, scoped, tag = 'internal scratch']
  %s0 = inlined_call_operand.vmem [shape: bf16[2,64,16], index: 0, kind: input, shape index: {}]
  %s1 = inlined_call_operand.vmem [shape: bf16[4,64,64], index: 1, kind: input, shape index: {}]
  %s2 = inlined_call_operand.vmem [shape: f32[4,16,8], index: 2, kind: input, shape index: {}]
  %s3 = inlined_call_operand.vmem [shape: f32[64,1], index: 3, kind: input, shape index: {}]
  %s4 = inlined_call_operand.vmem [shape: bf16[4,64,64], index: 4, kind: input, shape index: {}]
  %s5 = inlined_call_operand.vmem [shape: f32[4,8,4], index: 5, kind: input, shape index: {}]
  %s6 = inlined_call_operand.vmem [shape: f32[64,1], index: 6, kind: input, shape index: {}]
  %s7 = inlined_call_operand.vmem [shape: bf16[64,64], index: 7, kind: input, shape index: {}]
  %s8 = inlined_call_operand.vmem [shape: f32[64,1], index: 8, kind: input, shape index: {}]
  %s9 = inlined_call_operand.vmem [shape: f32[2,64,4], index: 9, kind: output, shape index: {}]
  %s10 = sld [smem:[#allocation0]]
  $region69: #{forward.1} parent=0
    _
  %s12 = ssub.s32 1, %s10
  %s13 = scalar_select 0, %s12, %s10
  loop: start=0, step=1, limit=4
  $region2: #{forward.1} parent=0 // loop_pre_header
    _
  $region3: #{forward.1} parent=0 // loop_header
    %s15 = sphi 0, %s19
    %p16 = scmp.ge.s32.totalorder %s15, 4
    %s25 = sphi 0, %s27
    %s28 = sphi 0, %s25
    %s29 = sphi 0, %s28
    %s45 = sphi 0, %s29
    %s49 = sphi 0, %s49
    %s51 = sphi 0, %s49
    %s52 = sphi 0, %s51
    %s66 = sphi 0, %s52
    %s70 = sphi 0, %s70
    %s72 = sphi 0, %s70
    %s73 = sphi 0, %s72
    %s87 = sphi 0, %s73
    %s91 = sphi 0, %s91
    %s93 = sphi 0, %s91
    %s94 = sphi 0, %s93
    %s108 = sphi 0, %s94
    %s112 = sphi 0, %s112
    %s114 = sphi 0, %s112
    %s115 = sphi 0, %s114
    %s129 = sphi 0, %s115
    %s133 = sphi 0, %s133
    %s135 = sphi 0, %s133
    %s136 = sphi 0, %s135
    %s150 = sphi 0, %s136
    %s154 = sphi 0, %s154
    %s156 = sphi 0, %s154
    %s157 = sphi 0, %s156
    %s171 = sphi 0, %s157
    %s175 = sphi 0, %s175
    %s177 = sphi 0, %s175
    %s178 = sphi 0, %s177
    %s192 = sphi 0, %s178
    %s196 = sphi 0, %s196
    %s198 = sphi 0, %s196
    %s199 = sphi 0, %s198
    %s213 = sphi 0, %s199
    %s219 = sphi 0, %s221
    %s222 = sphi 0, %s219
    %s223 = sphi 0, %s222
    %s239 = sphi 0, %s223
  $region4: #{forward.1} parent=0 // loop_header_branch
    %18 = sbr.rel (%p16) target = $region8
  $region5: #{forward.1} parent=0 // loop_body
    %s20 = ssub.s32 %s15, 1
    %s21 = ssub.s32 %s15, 2
    %s22 = sadd.s32 %s15, 1
    %s23 = ssub.s32 %s15, %s22
    %p24 = scmp.eq.s32.totalorder %s23, 0
    %s26 = sadd.s32 %s25, 1
    %s27 = scalar_select %p24, %s25, %s26
    %p30 = pneg %p24
    %p31 = scmp.eq.s32.totalorder %s15, 1
    %p32 = por %p30, %p31
    %p33 = scmp.ne.s32.totalorder %s25, %s28
    %p34 = scmp.eq.s32.totalorder %s15, 0
    %p35 = por %p33, %p34
    %p36 = scmp.ne.s32.totalorder %s25, %s28
    %p37 = scmp.eq.s32.totalorder %s20, 1
    %p38 = por %p36, %p37
    %p39 = scmp.ne.s32.totalorder %s28, %s29
    %p40 = scmp.eq.s32.totalorder %s20, 0
    %p41 = por %p39, %p40
    %p42 = scmp.ne.s32.totalorder %s28, %s29
    %p43 = scmp.eq.s32.totalorder %s21, 1
    %p44 = por %p42, %p43
    %p46 = scmp.ne.s32.totalorder %s29, %s45
    %p47 = scmp.eq.s32.totalorder %s21, 0
    %p48 = por %p46, %p47
    %s50 = sadd.s32 %s49, 1
    %p53 = scmp.eq.s32.totalorder %s15, 1
    %p54 = scmp.ne.s32.totalorder %s49, %s51
    %p55 = scmp.eq.s32.totalorder %s15, 0
    %p56 = por %p54, %p55
    %p57 = scmp.ne.s32.totalorder %s49, %s51
    %p58 = scmp.eq.s32.totalorder %s20, 1
    %p59 = por %p57, %p58
    %p60 = scmp.ne.s32.totalorder %s51, %s52
    %p61 = scmp.eq.s32.totalorder %s20, 0
    %p62 = por %p60, %p61
    %p63 = scmp.ne.s32.totalorder %s51, %s52
    %p64 = scmp.eq.s32.totalorder %s21, 1
    %p65 = por %p63, %p64
    %p67 = scmp.ne.s32.totalorder %s52, %s66
    %p68 = scmp.eq.s32.totalorder %s21, 0
    %p69 = por %p67, %p68
    %s71 = sadd.s32 %s70, 1
    %p74 = scmp.eq.s32.totalorder %s15, 1
    %p75 = scmp.ne.s32.totalorder %s70, %s72
    %p76 = scmp.eq.s32.totalorder %s15, 0
    %p77 = por %p75, %p76
    %p78 = scmp.ne.s32.totalorder %s70, %s72
    %p79 = scmp.eq.s32.totalorder %s20, 1
    %p80 = por %p78, %p79
    %p81 = scmp.ne.s32.totalorder %s72, %s73
    %p82 = scmp.eq.s32.totalorder %s20, 0
    %p83 = por %p81, %p82
    %p84 = scmp.ne.s32.totalorder %s72, %s73
    %p85 = scmp.eq.s32.totalorder %s21, 1
    %p86 = por %p84, %p85
    %p88 = scmp.ne.s32.totalorder %s73, %s87
    %p89 = scmp.eq.s32.totalorder %s21, 0
    %p90 = por %p88, %p89
    %s92 = sadd.s32 %s91, 1
    %p95 = scmp.eq.s32.totalorder %s15, 1
    %p96 = scmp.ne.s32.totalorder %s91, %s93
    %p97 = scmp.eq.s32.totalorder %s15, 0
    %p98 = por %p96, %p97
    %p99 = scmp.ne.s32.totalorder %s91, %s93
    %p100 = scmp.eq.s32.totalorder %s20, 1
    %p101 = por %p99, %p100
    %p102 = scmp.ne.s32.totalorder %s93, %s94
    %p103 = scmp.eq.s32.totalorder %s20, 0
    %p104 = por %p102, %p103
    %p105 = scmp.ne.s32.totalorder %s93, %s94
    %p106 = scmp.eq.s32.totalorder %s21, 1
    %p107 = por %p105, %p106
    %p109 = scmp.ne.s32.totalorder %s94, %s108
    %p110 = scmp.eq.s32.totalorder %s21, 0
    %p111 = por %p109, %p110
    %s113 = sadd.s32 %s112, 1
    %p116 = scmp.eq.s32.totalorder %s15, 1
    %p117 = scmp.ne.s32.totalorder %s112, %s114
    %p118 = scmp.eq.s32.totalorder %s15, 0
    %p119 = por %p117, %p118
    %p120 = scmp.ne.s32.totalorder %s112, %s114
    %p121 = scmp.eq.s32.totalorder %s20, 1
    %p122 = por %p120, %p121
    %p123 = scmp.ne.s32.totalorder %s114, %s115
    %p124 = scmp.eq.s32.totalorder %s20, 0
    %p125 = por %p123, %p124
    %p126 = scmp.ne.s32.totalorder %s114, %s115
    %p127 = scmp.eq.s32.totalorder %s21, 1
    %p128 = por %p126, %p127
    %p130 = scmp.ne.s32.totalorder %s115, %s129
    %p131 = scmp.eq.s32.totalorder %s21, 0
    %p132 = por %p130, %p131
    %s134 = sadd.s32 %s133, 1
    %p137 = scmp.eq.s32.totalorder %s15, 1
    %p138 = scmp.ne.s32.totalorder %s133, %s135
    %p139 = scmp.eq.s32.totalorder %s15, 0
    %p140 = por %p138, %p139
    %p141 = scmp.ne.s32.totalorder %s133, %s135
    %p142 = scmp.eq.s32.totalorder %s20, 1
    %p143 = por %p141, %p142
    %p144 = scmp.ne.s32.totalorder %s135, %s136
    %p145 = scmp.eq.s32.totalorder %s20, 0
    %p146 = por %p144, %p145
    %p147 = scmp.ne.s32.totalorder %s135, %s136
    %p148 = scmp.eq.s32.totalorder %s21, 1
    %p149 = por %p147, %p148
    %p151 = scmp.ne.s32.totalorder %s136, %s150
    %p152 = scmp.eq.s32.totalorder %s21, 0
    %p153 = por %p151, %p152
    %s155 = sadd.s32 %s154, 1
    %p158 = scmp.eq.s32.totalorder %s15, 1
    %p159 = scmp.ne.s32.totalorder %s154, %s156
    %p160 = scmp.eq.s32.totalorder %s15, 0
    %p161 = por %p159, %p160
    %p162 = scmp.ne.s32.totalorder %s154, %s156
    %p163 = scmp.eq.s32.totalorder %s20, 1
    %p164 = por %p162, %p163
    %p165 = scmp.ne.s32.totalorder %s156, %s157
    %p166 = scmp.eq.s32.totalorder %s20, 0
    %p167 = por %p165, %p166
    %p168 = scmp.ne.s32.totalorder %s156, %s157
    %p169 = scmp.eq.s32.totalorder %s21, 1
    %p170 = por %p168, %p169
    %p172 = scmp.ne.s32.totalorder %s157, %s171
    %p173 = scmp.eq.s32.totalorder %s21, 0
    %p174 = por %p172, %p173
    %s176 = sadd.s32 %s175, 1
    %p179 = scmp.eq.s32.totalorder %s15, 1
    %p180 = scmp.ne.s32.totalorder %s175, %s177
    %p181 = scmp.eq.s32.totalorder %s15, 0
    %p182 = por %p180, %p181
    %p183 = scmp.ne.s32.totalorder %s175, %s177
    %p184 = scmp.eq.s32.totalorder %s20, 1
    %p185 = por %p183, %p184
    %p186 = scmp.ne.s32.totalorder %s177, %s178
    %p187 = scmp.eq.s32.totalorder %s20, 0
    %p188 = por %p186, %p187
    %p189 = scmp.ne.s32.totalorder %s177, %s178
    %p190 = scmp.eq.s32.totalorder %s21, 1
    %p191 = por %p189, %p190
    %p193 = scmp.ne.s32.totalorder %s178, %s192
    %p194 = scmp.eq.s32.totalorder %s21, 0
    %p195 = por %p193, %p194
    %s197 = sadd.s32 %s196, 1
    %p200 = scmp.eq.s32.totalorder %s15, 1
    %p201 = scmp.ne.s32.totalorder %s196, %s198
    %p202 = scmp.eq.s32.totalorder %s15, 0
    %p203 = por %p201, %p202
    %p204 = scmp.ne.s32.totalorder %s196, %s198
    %p205 = scmp.eq.s32.totalorder %s20, 1
    %p206 = por %p204, %p205
    %p207 = scmp.ne.s32.totalorder %s198, %s199
    %p208 = scmp.eq.s32.totalorder %s20, 0
    %p209 = por %p207, %p208
    %p210 = scmp.ne.s32.totalorder %s198, %s199
    %p211 = scmp.eq.s32.totalorder %s21, 1
    %p212 = por %p210, %p211
    %p214 = scmp.ne.s32.totalorder %s199, %s213
    %p215 = scmp.eq.s32.totalorder %s21, 0
    %p216 = por %p214, %p215
    %s217 = ssub.s32 %s15, %s22
    %p218 = scmp.eq.s32.totalorder %s217, 0
    %s220 = sadd.s32 %s219, 1
    %s221 = scalar_select %p218, %s219, %s220
    %p224 = pneg %p218
    %p225 = scmp.eq.s32.totalorder %s15, 1
    %p226 = por %p224, %p225
    %p227 = scmp.ne.s32.totalorder %s219, %s222
    %p228 = scmp.eq.s32.totalorder %s15, 0
    %p229 = por %p227, %p228
    %p230 = scmp.ne.s32.totalorder %s219, %s222
    %p231 = scmp.eq.s32.totalorder %s20, 1
    %p232 = por %p230, %p231
    %p233 = scmp.ne.s32.totalorder %s222, %s223
    %p234 = scmp.eq.s32.totalorder %s20, 0
    %p235 = por %p233, %p234
    %p236 = scmp.ne.s32.totalorder %s222, %s223
    %p237 = scmp.eq.s32.totalorder %s21, 1
    %p238 = por %p236, %p237
    %p240 = scmp.ne.s32.totalorder %s223, %s239
    %p241 = scmp.eq.s32.totalorder %s21, 0
    %p242 = por %p240, %p241
    %p243 = scmp.le.s32.totalorder 1, %s15
    %p244 = scmp.lt.s32.totalorder %s15, 3
    %p245 = pnand %p243, %p244
    %p246 = pneg %p245
    // Predicated region
    $region9: #{forward.1} parent=5 // pred_check
      _
    $region10: #{forward.1} parent=5 // pred_check_branch
      %248 = sbr.rel (%p245) target = $region12
    $region11: #{forward.1} parent=5 // pred_region
      %s249 = ssub.s32 %s15, 1
      // Predicated region
      $region13: #{forward.1} parent=11 // pred_check
        %p250 = pneg %p62
      $region14: #{forward.1} parent=11 // pred_check_branch
        %252 = sbr.rel (%p250) target = $region16
      $region15: #{forward.1} parent=11 // pred_region
        _
      $region16: #{forward.1} parent=11 // pred_fallthru
        _
      // Predicated region
      $region17: #{forward.1} parent=11 // pred_check
        %p253 = pneg %p83
      $region18: #{forward.1} parent=11 // pred_check_branch
        %255 = sbr.rel (%p253) target = $region20
      $region19: #{forward.1} parent=11 // pred_region
        _
      $region20: #{forward.1} parent=11 // pred_fallthru
        _
      // Predicated region
      $region21: #{forward.1} parent=11 // pred_check
        %p256 = pneg %p104
      $region22: #{forward.1} parent=11 // pred_check_branch
        %258 = sbr.rel (%p256) target = $region24
      $region23: #{forward.1} parent=11 // pred_region
        _
      $region24: #{forward.1} parent=11 // pred_fallthru
        _
      // Predicated region
      $region25: #{forward.1} parent=11 // pred_check
        %p259 = pneg %p125
      $region26: #{forward.1} parent=11 // pred_check_branch
        %261 = sbr.rel (%p259) target = $region28
      $region27: #{forward.1} parent=11 // pred_region
        _
      $region28: #{forward.1} parent=11 // pred_fallthru
        _
      // Predicated region
      $region29: #{forward.1} parent=11 // pred_check
        %p262 = pneg %p146
      $region30: #{forward.1} parent=11 // pred_check_branch
        %264 = sbr.rel (%p262) target = $region32
      $region31: #{forward.1} parent=11 // pred_region
        _
      $region32: #{forward.1} parent=11 // pred_fallthru
        _
      // Predicated region
      $region33: #{forward.1} parent=11 // pred_check
        %p265 = pneg %p167
      $region34: #{forward.1} parent=11 // pred_check_branch
        %267 = sbr.rel (%p265) target = $region36
      $region35: #{forward.1} parent=11 // pred_region
        _
      $region36: #{forward.1} parent=11 // pred_fallthru
        _
      // Predicated region
      $region37: #{forward.1} parent=11 // pred_check
        %p268 = pneg %p188
      $region38: #{forward.1} parent=11 // pred_check_branch
        %270 = sbr.rel (%p268) target = $region40
      $region39: #{forward.1} parent=11 // pred_region
        _
      $region40: #{forward.1} parent=11 // pred_fallthru
        _
      // Predicated region
      $region41: #{forward.1} parent=11 // pred_check
        %p271 = pneg %p209
      $region42: #{forward.1} parent=11 // pred_check_branch
        %273 = sbr.rel (%p271) target = $region44
      $region43: #{forward.1} parent=11 // pred_region
        _
      $region44: #{forward.1} parent=11 // pred_fallthru
        _
    $region12: #{forward.1} parent=5 // pred_fallthru
      _
    %p274 = scmp.lt.s32.totalorder %s15, 2
    // Predicated region
    $region45: #{forward.1} parent=5 // pred_check
      %p275 = pneg %p274
    $region46: #{forward.1} parent=5 // pred_check_branch
      %277 = sbr.rel (%p275) target = $region48
    $region47: #{forward.1} parent=5 // pred_region
      // Predicated region
      $region49: #{forward.1} parent=47 // pred_check
        %p278 = pneg %p35
      $region50: #{forward.1} parent=47 // pred_check_branch
        %280 = sbr.rel (%p278) target = $region52
      $region51: #{forward.1} parent=47 // pred_region
        %p281 = scmp.lt.s32.totalorder %s15, 1
        %s282 = scalar_select %p281, %s15, 1
        %s283 = smul.addr %s282, 8
        %s284 = smul.addr %s283, 4
        %s285 = scalar_lea.vmem %s0, %s284
      $region52: #{forward.1} parent=47 // pred_fallthru
        _
    $region48: #{forward.1} parent=5 // pred_fallthru
      _
    %p286 = scmp.le.s32.totalorder 1, %s15
    %p287 = scmp.lt.s32.totalorder %s15, 3
    %p288 = pnand %p286, %p287
    %p289 = pneg %p288
    // Predicated region
    $region53: #{forward.1} parent=5 // pred_check
      _
    $region54: #{forward.1} parent=5 // pred_check_branch
      %291 = sbr.rel (%p288) target = $region56
    $region55: #{forward.1} parent=5 // pred_region
      %s292 = ssub.s32 %s15, 1
      %p293 = scmp.lt.s32.totalorder %s20, 1
      %s294 = scalar_select %p293, %s20, 1
      %s295 = smul.addr %s294, 8
      %s296 = smul.addr %s295, 4
      %s297 = scalar_lea.vmem %s0, %s296
      %p298 = pneg %p41
      %p299 = pneg %p38
      %p300 = pneg %p62
      %p301 = pneg %p59
      %p302 = pneg %p83
      %p303 = pneg %p80
      %p304 = pneg %p104
      %p305 = pneg %p101
      %p306 = pneg %p125
      %p307 = pneg %p122
      %p308 = pneg %p146
      %p309 = pneg %p143
      %p310 = pneg %p167
      %p311 = pneg %p164
      %p312 = pneg %p188
      %p313 = pneg %p185
      %p314 = pneg %p209
      %p315 = pneg %p206
      %p316 = pneg %p235
      %p317 = pneg %p232
      %p318 = scmp.lt.s32.totalorder %s20, 1
      %s319 = scalar_select %p318, %s20, 1
      %s320 = smul.addr %s319, 8
      %s321 = smul.addr %s320, 8
      %s322 = scalar_lea.vmem %s9, %s321
      %p323 = scmp.lt.s32.totalorder %s20, 1
      %s324 = scalar_select %p323, %s20, 1
      %s325 = smul.addr %s324, 8
      %s326 = smul.addr %s325, 4
      %s327 = scalar_lea.vmem %s0, %s326
      %p328 = scmp.lt.s32.totalorder %s20, 1
      %s329 = scalar_select %p328, %s20, 1
      %s330 = smul.addr %s329, 8
      %s331 = smul.addr %s330, 8
      %s332 = scalar_lea.vmem %s9, %s331
      %v334 = vld [vmem:[%s327] sm:$0xf]
      %v335 = vld [vmem:[%s327 + $0x4] sm:$0xf]
      %v336 = vld [vmem:[%s327 + $0x8] sm:$0xf]
      %v337 = vld [vmem:[%s327 + $0xc] sm:$0xf]
      %v338 = vld [vmem:[%s327 + $0x10] sm:$0xf]
      %v339 = vld [vmem:[%s327 + $0x14] sm:$0xf]
      %v340 = vld [vmem:[%s327 + $0x18] sm:$0xf]
      %v341 = vld [vmem:[%s327 + $0x1c] sm:$0xf]
      %v342 = vld [vmem:[%s1] sm:$0xf]
      %v343 = vld [vmem:[%s1 + $0x4] sm:$0xf]
      %v344 = vld [vmem:[%s1 + $0x8] sm:$0xf]
      %v345 = vld [vmem:[%s1 + $0xc] sm:$0xf]
      %v346 = vld [vmem:[%s1 + $0x10] sm:$0xf]
      %v347 = vld [vmem:[%s1 + $0x14] sm:$0xf]
      %v348 = vld [vmem:[%s1 + $0x18] sm:$0xf]
      %v349 = vld [vmem:[%s1 + $0x1c] sm:$0xf]
      %v358 = vunpack.c.l.b16 %v342
      %v359 = vunpack.c.l.b16 %v343
      %v360 = vunpack.c.l.b16 %v344
      %v361 = vunpack.c.l.b16 %v345
      %v362 = vunpack.c.l.b16 %v346
      %v363 = vunpack.c.l.b16 %v347
      %v364 = vunpack.c.l.b16 %v348
      %v365 = vunpack.c.l.b16 %v349
      %v366 = vpack.c.b16 %v359, %v358
      %v367 = vpack.c.b16 %v361, %v360
      %v368 = vpack.c.b16 %v363, %v362
      %v369 = vpack.c.b16 %v365, %v364
      %v378 = vunpack.c.l.b16 %v334
      %v379 = vunpack.c.l.b16 %v335
      %v380 = vunpack.c.l.b16 %v336
      %v381 = vunpack.c.l.b16 %v337
      %v382 = vunpack.c.l.b16 %v338
      %v383 = vunpack.c.l.b16 %v339
      %v384 = vunpack.c.l.b16 %v340
      %v385 = vunpack.c.l.b16 %v341
      %v386 = vpack.c.b16 %v379, %v378
      %v387 = vpack.c.b16 %v381, %v380
      %v388 = vpack.c.b16 %v383, %v382
      %v389 = vpack.c.b16 %v385, %v384
      %vm394 = vcmask 523264
      %v396 = vsel %vm394, %v366, 0
      %v399 = vsel %vm394, %v367, 0
      %v402 = vsel %vm394, %v368, 0
      %v405 = vsel %vm394, %v369, 0
      %407 = vmatpush.bf16.msra.mxu0 0
      %408 = vmatpush.bf16.msra.mxu0 0
      %409 = vmatpush.bf16.msra.mxu0 0
      %410 = vmatpush.bf16.msra.mxu0 0
      %411 = vmatpush.bf16.msra.mxu0 %v389
      %412 = vmatpush.bf16.msra.mxu0 %v388
      %413 = vmatpush.bf16.msra.mxu0 %v387
      %414 = vmatpush.bf16.msra.mxu0 %v386
      %415 = vmatmul.bf16.gmra.mxu0 %v396
      %v416 = vpop.f32.mrf.mxu0
      %v417 = vadd.f32 0.0, %v416
      %v418 = vpop.f32.mrf.mxu0
      %v419 = vadd.f32 0.0, %v418
      %420 = vmatmul.bf16.gmra.mxu0 %v399
      %v421 = vpop.f32.mrf.mxu0
      %v422 = vadd.f32 0.0, %v421
      %v423 = vpop.f32.mrf.mxu0
      %v424 = vadd.f32 0.0, %v423
      %425 = vmatmul.bf16.gmra.mxu0 %v402
      %v426 = vpop.f32.mrf.mxu0
      %v427 = vadd.f32 0.0, %v426
      %v428 = vpop.f32.mrf.mxu0
      %v429 = vadd.f32 0.0, %v428
      %430 = vmatmul.bf16.gmra.mxu0 %v405
      %v431 = vpop.f32.mrf.mxu0
      %v432 = vadd.f32 0.0, %v431
      %v433 = vpop.f32.mrf.mxu0
      %v434 = vadd.f32 0.0, %v433
      %435 = vdwg.mxu0
      %v436 = vld [vmem:[%s2] sm:$0xff]
      %v437 = vld [vmem:[%s2 + $0x8] sm:$0xff]
      %s438 = scalar_lea.vmem %s1, 32
      %v439 = vld [vmem:[%s438] sm:$0xf]
      %v440 = vld [vmem:[%s438 + $0x4] sm:$0xf]
      %v441 = vld [vmem:[%s438 + $0x8] sm:$0xf]
      %v442 = vld [vmem:[%s438 + $0xc] sm:$0xf]
      %v443 = vld [vmem:[%s438 + $0x10] sm:$0xf]
      %v444 = vld [vmem:[%s438 + $0x14] sm:$0xf]
      %v445 = vld [vmem:[%s438 + $0x18] sm:$0xf]
      %v446 = vld [vmem:[%s438 + $0x1c] sm:$0xf]
      %v455 = vunpack.c.l.b16 %v439
      %v456 = vunpack.c.l.b16 %v440
      %v457 = vunpack.c.l.b16 %v441
      %v458 = vunpack.c.l.b16 %v442
      %v459 = vunpack.c.l.b16 %v443
      %v460 = vunpack.c.l.b16 %v444
      %v461 = vunpack.c.l.b16 %v445
      %v462 = vunpack.c.l.b16 %v446
      %v463 = vpack.c.b16 %v456, %v455
      %v464 = vpack.c.b16 %v458, %v457
      %v465 = vpack.c.b16 %v460, %v459
      %v466 = vpack.c.b16 %v462, %v461
      %v468 = vsel %vm394, %v463, 0
      %v471 = vsel %vm394, %v464, 0
      %v474 = vsel %vm394, %v465, 0
      %v477 = vsel %vm394, %v466, 0
      %479 = vmatpush.bf16.msra.mxu0 0
      %480 = vmatpush.bf16.msra.mxu0 0
      %481 = vmatpush.bf16.msra.mxu0 0
      %482 = vmatpush.bf16.msra.mxu0 0
      %483 = vmatpush.bf16.msra.mxu0 %v389
      %484 = vmatpush.bf16.msra.mxu0 %v388
      %485 = vmatpush.bf16.msra.mxu0 %v387
      %486 = vmatpush.bf16.msra.mxu0 %v386
      %487 = vmatmul.bf16.gmra.mxu0 %v468
      %v488 = vpop.f32.mrf.mxu0
      %v489 = vadd.f32 0.0, %v488
      %v490 = vpop.f32.mrf.mxu0
      %v491 = vadd.f32 0.0, %v490
      %492 = vmatmul.bf16.gmra.mxu0 %v471
      %v493 = vpop.f32.mrf.mxu0
      %v494 = vadd.f32 0.0, %v493
      %v495 = vpop.f32.mrf.mxu0
      %v496 = vadd.f32 0.0, %v495
      %497 = vmatmul.bf16.gmra.mxu0 %v474
      %v498 = vpop.f32.mrf.mxu0
      %v499 = vadd.f32 0.0, %v498
      %v500 = vpop.f32.mrf.mxu0
      %v501 = vadd.f32 0.0, %v500
      %502 = vmatmul.bf16.gmra.mxu0 %v477
      %v503 = vpop.f32.mrf.mxu0
      %v504 = vadd.f32 0.0, %v503
      %v505 = vpop.f32.mrf.mxu0
      %v506 = vadd.f32 0.0, %v505
      %507 = vdwg.mxu0
      %s508 = scalar_lea.vmem %s2, 16
      %v509 = vld [vmem:[%s508] sm:$0xff]
      %v510 = vld [vmem:[%s508 + $0x8] sm:$0xff]
      %vm511 = vcmask 130048
      %v513 = vsel %vm511, %v489, 0
      %v516 = vsel %vm511, %v491, 0
      %v519 = vsel %vm511, %v494, 0
      %v522 = vsel %vm511, %v496, 0
      %v525 = vsel %vm511, %v499, 0
      %v528 = vsel %vm511, %v501, 0
      %v531 = vsel %vm511, %v504, 0
      %v534 = vsel %vm511, %v506, 0
      %536 = vmatpush.msra.mxu0 0.0
      %537 = vmatpush.msra.mxu0 0.0
      %538 = vmatpush.msra.mxu0 0.0
      %539 = vmatpush.msra.mxu0 0.0
      %540 = vmatpush.msra.mxu0 0.0
      %541 = vmatpush.msra.mxu0 0.0
      %542 = vmatpush.msra.mxu0 0.0
      %543 = vmatpush.msra.mxu0 0.0
      %544 = vmatpush.msra.mxu0 0.0
      %545 = vmatpush.msra.mxu0 0.0
      %546 = vmatpush.msra.mxu0 0.0
      %547 = vmatpush.msra.mxu0 0.0
      %548 = vmatpush.msra.mxu0 0.0
      %549 = vmatpush.msra.mxu0 0.0
      %550 = vmatpush.msra.mxu0 %v510
      %551 = vmatpush.msra.mxu0 %v509
      %552 = vmatmul.f32.gmra.mxu0 %v513
      %v553 = vpop.f32.mrf.mxu0
      %v554 = vadd.f32 0.0, %v553
      %555 = vmatmul.f32.gmra.mxu0 %v516
      %v556 = vpop.f32.mrf.mxu0
      %v557 = vadd.f32 0.0, %v556
      %558 = vmatmul.f32.gmra.mxu0 %v519
      %v559 = vpop.f32.mrf.mxu0
      %v560 = vadd.f32 0.0, %v559
      %561 = vmatmul.f32.gmra.mxu0 %v522
      %v562 = vpop.f32.mrf.mxu0
      %v563 = vadd.f32 0.0, %v562
      %564 = vmatmul.f32.gmra.mxu0 %v525
      %v565 = vpop.f32.mrf.mxu0
      %v566 = vadd.f32 0.0, %v565
      %567 = vmatmul.f32.gmra.mxu0 %v528
      %v568 = vpop.f32.mrf.mxu0
      %v569 = vadd.f32 0.0, %v568
      %570 = vmatmul.f32.gmra.mxu0 %v531
      %v571 = vpop.f32.mrf.mxu0
      %v572 = vadd.f32 0.0, %v571
      %573 = vmatmul.f32.gmra.mxu0 %v534
      %v574 = vpop.f32.mrf.mxu0
      %v575 = vadd.f32 0.0, %v574
      %576 = vdwg.mxu0
      %v578 = vsel %vm511, %v417, 0
      %v581 = vsel %vm511, %v419, 0
      %v584 = vsel %vm511, %v422, 0
      %v587 = vsel %vm511, %v424, 0
      %v590 = vsel %vm511, %v427, 0
      %v593 = vsel %vm511, %v429, 0
      %v596 = vsel %vm511, %v432, 0
      %v599 = vsel %vm511, %v434, 0
      %601 = vmatpush.msra.mxu0 0.0
      %602 = vmatpush.msra.mxu0 0.0
      %603 = vmatpush.msra.mxu0 0.0
      %604 = vmatpush.msra.mxu0 0.0
      %605 = vmatpush.msra.mxu0 0.0
      %606 = vmatpush.msra.mxu0 0.0
      %607 = vmatpush.msra.mxu0 0.0
      %608 = vmatpush.msra.mxu0 0.0
      %609 = vmatpush.msra.mxu0 0.0
      %610 = vmatpush.msra.mxu0 0.0
      %611 = vmatpush.msra.mxu0 0.0
      %612 = vmatpush.msra.mxu0 0.0
      %613 = vmatpush.msra.mxu0 0.0
      %614 = vmatpush.msra.mxu0 0.0
      %615 = vmatpush.msra.mxu0 %v437
      %616 = vmatpush.msra.mxu0 %v436
      %617 = vmatmul.f32.gmra.mxu0 %v578
      %v618 = vpop.f32.mrf.mxu0
      %v619 = vadd.f32 %v554, %v618
      %620 = vmatmul.f32.gmra.mxu0 %v581
      %v621 = vpop.f32.mrf.mxu0
      %v622 = vadd.f32 %v557, %v621
      %623 = vmatmul.f32.gmra.mxu0 %v584
      %v624 = vpop.f32.mrf.mxu0
      %v625 = vadd.f32 %v560, %v624
      %626 = vmatmul.f32.gmra.mxu0 %v587
      %v627 = vpop.f32.mrf.mxu0
      %v628 = vadd.f32 %v563, %v627
      %629 = vmatmul.f32.gmra.mxu0 %v590
      %v630 = vpop.f32.mrf.mxu0
      %v631 = vadd.f32 %v566, %v630
      %632 = vmatmul.f32.gmra.mxu0 %v593
      %v633 = vpop.f32.mrf.mxu0
      %v634 = vadd.f32 %v569, %v633
      %635 = vmatmul.f32.gmra.mxu0 %v596
      %v636 = vpop.f32.mrf.mxu0
      %v637 = vadd.f32 %v572, %v636
      %638 = vmatmul.f32.gmra.mxu0 %v599
      %v639 = vpop.f32.mrf.mxu0
      %v640 = vadd.f32 %v575, %v639
      %641 = vdwg.mxu0
      %s642 = scalar_lea.vmem %s1, 64
      %v643 = vld [vmem:[%s642] sm:$0xf]
      %v644 = vld [vmem:[%s642 + $0x4] sm:$0xf]
      %v645 = vld [vmem:[%s642 + $0x8] sm:$0xf]
      %v646 = vld [vmem:[%s642 + $0xc] sm:$0xf]
      %v647 = vld [vmem:[%s642 + $0x10] sm:$0xf]
      %v648 = vld [vmem:[%s642 + $0x14] sm:$0xf]
      %v649 = vld [vmem:[%s642 + $0x18] sm:$0xf]
      %v650 = vld [vmem:[%s642 + $0x1c] sm:$0xf]
      %v659 = vunpack.c.l.b16 %v643
      %v660 = vunpack.c.l.b16 %v644
      %v661 = vunpack.c.l.b16 %v645
      %v662 = vunpack.c.l.b16 %v646
      %v663 = vunpack.c.l.b16 %v647
      %v664 = vunpack.c.l.b16 %v648
      %v665 = vunpack.c.l.b16 %v649
      %v666 = vunpack.c.l.b16 %v650
      %v667 = vpack.c.b16 %v660, %v659
      %v668 = vpack.c.b16 %v662, %v661
      %v669 = vpack.c.b16 %v664, %v663
      %v670 = vpack.c.b16 %v666, %v665
      %v672 = vsel %vm394, %v667, 0
      %v675 = vsel %vm394, %v668, 0
      %v678 = vsel %vm394, %v669, 0
      %v681 = vsel %vm394, %v670, 0
      %683 = vmatpush.bf16.msra.mxu0 0
      %684 = vmatpush.bf16.msra.mxu0 0
      %685 = vmatpush.bf16.msra.mxu0 0
      %686 = vmatpush.bf16.msra.mxu0 0
      %687 = vmatpush.bf16.msra.mxu0 %v389
      %688 = vmatpush.bf16.msra.mxu0 %v388
      %689 = vmatpush.bf16.msra.mxu0 %v387
      %690 = vmatpush.bf16.msra.mxu0 %v386
      %691 = vmatmul.bf16.gmra.mxu0 %v672
      %v692 = vpop.f32.mrf.mxu0
      %v693 = vadd.f32 0.0, %v692
      %v694 = vpop.f32.mrf.mxu0
      %v695 = vadd.f32 0.0, %v694
      %696 = vmatmul.bf16.gmra.mxu0 %v675
      %v697 = vpop.f32.mrf.mxu0
      %v698 = vadd.f32 0.0, %v697
      %v699 = vpop.f32.mrf.mxu0
      %v700 = vadd.f32 0.0, %v699
      %701 = vmatmul.bf16.gmra.mxu0 %v678
      %v702 = vpop.f32.mrf.mxu0
      %v703 = vadd.f32 0.0, %v702
      %v704 = vpop.f32.mrf.mxu0
      %v705 = vadd.f32 0.0, %v704
      %706 = vmatmul.bf16.gmra.mxu0 %v681
      %v707 = vpop.f32.mrf.mxu0
      %v708 = vadd.f32 0.0, %v707
      %v709 = vpop.f32.mrf.mxu0
      %v710 = vadd.f32 0.0, %v709
      %711 = vdwg.mxu0
      %s712 = scalar_lea.vmem %s2, 32
      %v713 = vld [vmem:[%s712] sm:$0xff]
      %v714 = vld [vmem:[%s712 + $0x8] sm:$0xff]
      %v716 = vsel %vm511, %v693, 0
      %v719 = vsel %vm511, %v695, 0
      %v722 = vsel %vm511, %v698, 0
      %v725 = vsel %vm511, %v700, 0
      %v728 = vsel %vm511, %v703, 0
      %v731 = vsel %vm511, %v705, 0
      %v734 = vsel %vm511, %v708, 0
      %v737 = vsel %vm511, %v710, 0
      %739 = vmatpush.msra.mxu0 0.0
      %740 = vmatpush.msra.mxu0 0.0
      %741 = vmatpush.msra.mxu0 0.0
      %742 = vmatpush.msra.mxu0 0.0
      %743 = vmatpush.msra.mxu0 0.0
      %744 = vmatpush.msra.mxu0 0.0
      %745 = vmatpush.msra.mxu0 0.0
      %746 = vmatpush.msra.mxu0 0.0
      %747 = vmatpush.msra.mxu0 0.0
      %748 = vmatpush.msra.mxu0 0.0
      %749 = vmatpush.msra.mxu0 0.0
      %750 = vmatpush.msra.mxu0 0.0
      %751 = vmatpush.msra.mxu0 0.0
      %752 = vmatpush.msra.mxu0 0.0
      %753 = vmatpush.msra.mxu0 %v714
      %754 = vmatpush.msra.mxu0 %v713
      %755 = vmatmul.f32.gmra.mxu0 %v716
      %v756 = vpop.f32.mrf.mxu0
      %v757 = vadd.f32 0.0, %v756
      %758 = vmatmul.f32.gmra.mxu0 %v719
      %v759 = vpop.f32.mrf.mxu0
      %v760 = vadd.f32 0.0, %v759
      %761 = vmatmul.f32.gmra.mxu0 %v722
      %v762 = vpop.f32.mrf.mxu0
      %v763 = vadd.f32 0.0, %v762
      %764 = vmatmul.f32.gmra.mxu0 %v725
      %v765 = vpop.f32.mrf.mxu0
      %v766 = vadd.f32 0.0, %v765
      %767 = vmatmul.f32.gmra.mxu0 %v728
      %v768 = vpop.f32.mrf.mxu0
      %v769 = vadd.f32 0.0, %v768
      %770 = vmatmul.f32.gmra.mxu0 %v731
      %v771 = vpop.f32.mrf.mxu0
      %v772 = vadd.f32 0.0, %v771
      %773 = vmatmul.f32.gmra.mxu0 %v734
      %v774 = vpop.f32.mrf.mxu0
      %v775 = vadd.f32 0.0, %v774
      %776 = vmatmul.f32.gmra.mxu0 %v737
      %v777 = vpop.f32.mrf.mxu0
      %v778 = vadd.f32 0.0, %v777
      %779 = vdwg.mxu0
      %v780 = vadd.f32 %v619, %v757
      %v781 = vadd.f32 %v622, %v760
      %v782 = vadd.f32 %v625, %v763
      %v783 = vadd.f32 %v628, %v766
      %v784 = vadd.f32 %v631, %v769
      %v785 = vadd.f32 %v634, %v772
      %v786 = vadd.f32 %v637, %v775
      %v787 = vadd.f32 %v640, %v778
      %s788 = scalar_lea.vmem %s1, 96
      %v789 = vld [vmem:[%s788] sm:$0xf]
      %v790 = vld [vmem:[%s788 + $0x4] sm:$0xf]
      %v791 = vld [vmem:[%s788 + $0x8] sm:$0xf]
      %v792 = vld [vmem:[%s788 + $0xc] sm:$0xf]
      %v793 = vld [vmem:[%s788 + $0x10] sm:$0xf]
      %v794 = vld [vmem:[%s788 + $0x14] sm:$0xf]
      %v795 = vld [vmem:[%s788 + $0x18] sm:$0xf]
      %v796 = vld [vmem:[%s788 + $0x1c] sm:$0xf]
      %v805 = vunpack.c.l.b16 %v789
      %v806 = vunpack.c.l.b16 %v790
      %v807 = vunpack.c.l.b16 %v791
      %v808 = vunpack.c.l.b16 %v792
      %v809 = vunpack.c.l.b16 %v793
      %v810 = vunpack.c.l.b16 %v794
      %v811 = vunpack.c.l.b16 %v795
      %v812 = vunpack.c.l.b16 %v796
      %v813 = vpack.c.b16 %v806, %v805
      %v814 = vpack.c.b16 %v808, %v807
      %v815 = vpack.c.b16 %v810, %v809
      %v816 = vpack.c.b16 %v812, %v811
      %v818 = vsel %vm394, %v813, 0
      %v821 = vsel %vm394, %v814, 0
      %v824 = vsel %vm394, %v815, 0
      %v827 = vsel %vm394, %v816, 0
      %829 = vmatpush.bf16.msra.mxu0 0
      %830 = vmatpush.bf16.msra.mxu0 0
      %831 = vmatpush.bf16.msra.mxu0 0
      %832 = vmatpush.bf16.msra.mxu0 0
      %833 = vmatpush.bf16.msra.mxu0 %v389
      %834 = vmatpush.bf16.msra.mxu0 %v388
      %835 = vmatpush.bf16.msra.mxu0 %v387
      %836 = vmatpush.bf16.msra.mxu0 %v386
      %837 = vmatmul.bf16.gmra.mxu0 %v818
      %v838 = vpop.f32.mrf.mxu0
      %v839 = vadd.f32 0.0, %v838
      %v840 = vpop.f32.mrf.mxu0
      %v841 = vadd.f32 0.0, %v840
      %842 = vmatmul.bf16.gmra.mxu0 %v821
      %v843 = vpop.f32.mrf.mxu0
      %v844 = vadd.f32 0.0, %v843
      %v845 = vpop.f32.mrf.mxu0
      %v846 = vadd.f32 0.0, %v845
      %847 = vmatmul.bf16.gmra.mxu0 %v824
      %v848 = vpop.f32.mrf.mxu0
      %v849 = vadd.f32 0.0, %v848
      %v850 = vpop.f32.mrf.mxu0
      %v851 = vadd.f32 0.0, %v850
      %852 = vmatmul.bf16.gmra.mxu0 %v827
      %v853 = vpop.f32.mrf.mxu0
      %v854 = vadd.f32 0.0, %v853
      %v855 = vpop.f32.mrf.mxu0
      %v856 = vadd.f32 0.0, %v855
      %857 = vdwg.mxu0
      %s858 = scalar_lea.vmem %s2, 48
      %v859 = vld [vmem:[%s858] sm:$0xff]
      %v860 = vld [vmem:[%s858 + $0x8] sm:$0xff]
      %v862 = vsel %vm511, %v839, 0
      %v865 = vsel %vm511, %v841, 0
      %v868 = vsel %vm511, %v844, 0
      %v871 = vsel %vm511, %v846, 0
      %v874 = vsel %vm511, %v849, 0
      %v877 = vsel %vm511, %v851, 0
      %v880 = vsel %vm511, %v854, 0
      %v883 = vsel %vm511, %v856, 0
      %885 = vmatpush.msra.mxu0 0.0
      %886 = vmatpush.msra.mxu0 0.0
      %887 = vmatpush.msra.mxu0 0.0
      %888 = vmatpush.msra.mxu0 0.0
      %889 = vmatpush.msra.mxu0 0.0
      %890 = vmatpush.msra.mxu0 0.0
      %891 = vmatpush.msra.mxu0 0.0
      %892 = vmatpush.msra.mxu0 0.0
      %893 = vmatpush.msra.mxu0 0.0
      %894 = vmatpush.msra.mxu0 0.0
      %895 = vmatpush.msra.mxu0 0.0
      %896 = vmatpush.msra.mxu0 0.0
      %897 = vmatpush.msra.mxu0 0.0
      %898 = vmatpush.msra.mxu0 0.0
      %899 = vmatpush.msra.mxu0 %v860
      %900 = vmatpush.msra.mxu0 %v859
      %901 = vmatmul.f32.gmra.mxu0 %v862
      %v902 = vpop.f32.mrf.mxu0
      %v903 = vadd.f32 0.0, %v902
      %904 = vmatmul.f32.gmra.mxu0 %v865
      %v905 = vpop.f32.mrf.mxu0
      %v906 = vadd.f32 0.0, %v905
      %907 = vmatmul.f32.gmra.mxu0 %v868
      %v908 = vpop.f32.mrf.mxu0
      %v909 = vadd.f32 0.0, %v908
      %910 = vmatmul.f32.gmra.mxu0 %v871
      %v911 = vpop.f32.mrf.mxu0
      %v912 = vadd.f32 0.0, %v911
      %913 = vmatmul.f32.gmra.mxu0 %v874
      %v914 = vpop.f32.mrf.mxu0
      %v915 = vadd.f32 0.0, %v914
      %916 = vmatmul.f32.gmra.mxu0 %v877
      %v917 = vpop.f32.mrf.mxu0
      %v918 = vadd.f32 0.0, %v917
      %919 = vmatmul.f32.gmra.mxu0 %v880
      %v920 = vpop.f32.mrf.mxu0
      %v921 = vadd.f32 0.0, %v920
      %922 = vmatmul.f32.gmra.mxu0 %v883
      %v923 = vpop.f32.mrf.mxu0
      %v924 = vadd.f32 0.0, %v923
      %925 = vdwg.mxu0
      %v926 = vadd.f32 %v780, %v903
      %v927 = vadd.f32 %v781, %v906
      %v928 = vadd.f32 %v782, %v909
      %v929 = vadd.f32 %v783, %v912
      %v930 = vadd.f32 %v784, %v915
      %v931 = vadd.f32 %v785, %v918
      %v932 = vadd.f32 %v786, %v921
      %v933 = vadd.f32 %v787, %v924
      %v934 = vld [vmem:[%s3] sm:$0xff]
      %v935 = vld [vmem:[%s3 + $0x8] sm:$0xff]
      %v936 = vld [vmem:[%s3 + $0x10] sm:$0xff]
      %v937 = vld [vmem:[%s3 + $0x18] sm:$0xff]
      %v938 = vld [vmem:[%s3 + $0x20] sm:$0xff]
      %v939 = vld [vmem:[%s3 + $0x28] sm:$0xff]
      %v940 = vld [vmem:[%s3 + $0x30] sm:$0xff]
      %v941 = vld [vmem:[%s3 + $0x38] sm:$0xff]
      %943 = vset.pattern.permute.xlu0 0
      %944 = vperm.xlu0 %943, %v934
      %v945 = vpop.permute.xlu0 %944
      %948 = vset.pattern.permute.xlu0 0
      %949 = vperm.xlu0 %948, %v935
      %v950 = vpop.permute.xlu0 %949
      %953 = vset.pattern.permute.xlu0 0
      %954 = vperm.xlu0 %953, %v936
      %v955 = vpop.permute.xlu0 %954
      %958 = vset.pattern.permute.xlu0 0
      %959 = vperm.xlu0 %958, %v937
      %v960 = vpop.permute.xlu0 %959
      %963 = vset.pattern.permute.xlu0 0
      %964 = vperm.xlu0 %963, %v938
      %v965 = vpop.permute.xlu0 %964
      %968 = vset.pattern.permute.xlu0 0
      %969 = vperm.xlu0 %968, %v939
      %v970 = vpop.permute.xlu0 %969
      %973 = vset.pattern.permute.xlu0 0
      %974 = vperm.xlu0 %973, %v940
      %v975 = vpop.permute.xlu0 %974
      %978 = vset.pattern.permute.xlu0 0
      %979 = vperm.xlu0 %978, %v941
      %v980 = vpop.permute.xlu0 %979
      %v982 = vadd.f32 %v926, %v945
      %v983 = vadd.f32 %v927, %v950
      %v984 = vadd.f32 %v928, %v955
      %v985 = vadd.f32 %v929, %v960
      %v986 = vadd.f32 %v930, %v965
      %v987 = vadd.f32 %v931, %v970
      %v988 = vadd.f32 %v932, %v975
      %v989 = vadd.f32 %v933, %v980
      %v990 = vmax.f32 %v982, 0.0
      %v991 = vmax.f32 %v983, 0.0
      %v992 = vmax.f32 %v984, 0.0
      %v993 = vmax.f32 %v985, 0.0
      %v994 = vmax.f32 %v986, 0.0
      %v995 = vmax.f32 %v987, 0.0
      %v996 = vmax.f32 %v988, 0.0
      %v997 = vmax.f32 %v989, 0.0
      %v998 = vpack.c.bf16 %v991, %v990
      %v999 = vpack.c.bf16 %v993, %v992
      %v1000 = vpack.c.bf16 %v995, %v994
      %v1001 = vpack.c.bf16 %v997, %v996
      %v1002 = vld [vmem:[%s4] sm:$0xf]
      %v1003 = vld [vmem:[%s4 + $0x4] sm:$0xf]
      %v1004 = vld [vmem:[%s4 + $0x8] sm:$0xf]
      %v1005 = vld [vmem:[%s4 + $0xc] sm:$0xf]
      %v1006 = vld [vmem:[%s4 + $0x10] sm:$0xf]
      %v1007 = vld [vmem:[%s4 + $0x14] sm:$0xf]
      %v1008 = vld [vmem:[%s4 + $0x18] sm:$0xf]
      %v1009 = vld [vmem:[%s4 + $0x1c] sm:$0xf]
      %v1018 = vunpack.c.l.b16 %v1002
      %v1019 = vunpack.c.l.b16 %v1003
      %v1020 = vunpack.c.l.b16 %v1004
      %v1021 = vunpack.c.l.b16 %v1005
      %v1022 = vunpack.c.l.b16 %v1006
      %v1023 = vunpack.c.l.b16 %v1007
      %v1024 = vunpack.c.l.b16 %v1008
      %v1025 = vunpack.c.l.b16 %v1009
      %v1026 = vpack.c.b16 %v1019, %v1018
      %v1027 = vpack.c.b16 %v1021, %v1020
      %v1028 = vpack.c.b16 %v1023, %v1022
      %v1029 = vpack.c.b16 %v1025, %v1024
      %v1031 = vsel %vm394, %v1026, 0
      %v1034 = vsel %vm394, %v1027, 0
      %v1037 = vsel %vm394, %v1028, 0
      %v1040 = vsel %vm394, %v1029, 0
      %1042 = vmatpush.bf16.msra.mxu0 0
      %1043 = vmatpush.bf16.msra.mxu0 0
      %1044 = vmatpush.bf16.msra.mxu0 0
      %1045 = vmatpush.bf16.msra.mxu0 0
      %1046 = vmatpush.bf16.msra.mxu0 %v1001
      %1047 = vmatpush.bf16.msra.mxu0 %v1000
      %1048 = vmatpush.bf16.msra.mxu0 %v999
      %1049 = vmatpush.bf16.msra.mxu0 %v998
      %1050 = vmatmul.bf16.gmra.mxu0 %v1031
      %v1051 = vpop.f32.mrf.mxu0
      %v1052 = vadd.f32 0.0, %v1051
      %v1053 = vpop.f32.mrf.mxu0
      %v1054 = vadd.f32 0.0, %v1053
      %1055 = vmatmul.bf16.gmra.mxu0 %v1034
      %v1056 = vpop.f32.mrf.mxu0
      %v1057 = vadd.f32 0.0, %v1056
      %v1058 = vpop.f32.mrf.mxu0
      %v1059 = vadd.f32 0.0, %v1058
      %1060 = vmatmul.bf16.gmra.mxu0 %v1037
      %v1061 = vpop.f32.mrf.mxu0
      %v1062 = vadd.f32 0.0, %v1061
      %v1063 = vpop.f32.mrf.mxu0
      %v1064 = vadd.f32 0.0, %v1063
      %1065 = vmatmul.bf16.gmra.mxu0 %v1040
      %v1066 = vpop.f32.mrf.mxu0
      %v1067 = vadd.f32 0.0, %v1066
      %v1068 = vpop.f32.mrf.mxu0
      %v1069 = vadd.f32 0.0, %v1068
      %1070 = vdwg.mxu0
      %v1071 = vld [vmem:[%s5] sm:$0xff]
      %s1072 = scalar_lea.vmem %s4, 32
      %v1073 = vld [vmem:[%s1072] sm:$0xf]
      %v1074 = vld [vmem:[%s1072 + $0x4] sm:$0xf]
      %v1075 = vld [vmem:[%s1072 + $0x8] sm:$0xf]
      %v1076 = vld [vmem:[%s1072 + $0xc] sm:$0xf]
      %v1077 = vld [vmem:[%s1072 + $0x10] sm:$0xf]
      %v1078 = vld [vmem:[%s1072 + $0x14] sm:$0xf]
      %v1079 = vld [vmem:[%s1072 + $0x18] sm:$0xf]
      %v1080 = vld [vmem:[%s1072 + $0x1c] sm:$0xf]
      %v1089 = vunpack.c.l.b16 %v1073
      %v1090 = vunpack.c.l.b16 %v1074
      %v1091 = vunpack.c.l.b16 %v1075
      %v1092 = vunpack.c.l.b16 %v1076
      %v1093 = vunpack.c.l.b16 %v1077
      %v1094 = vunpack.c.l.b16 %v1078
      %v1095 = vunpack.c.l.b16 %v1079
      %v1096 = vunpack.c.l.b16 %v1080
      %v1097 = vpack.c.b16 %v1090, %v1089
      %v1098 = vpack.c.b16 %v1092, %v1091
      %v1099 = vpack.c.b16 %v1094, %v1093
      %v1100 = vpack.c.b16 %v1096, %v1095
      %v1102 = vsel %vm394, %v1097, 0
      %v1105 = vsel %vm394, %v1098, 0
      %v1108 = vsel %vm394, %v1099, 0
      %v1111 = vsel %vm394, %v1100, 0
      %1113 = vmatpush.bf16.msra.mxu0 0
      %1114 = vmatpush.bf16.msra.mxu0 0
      %1115 = vmatpush.bf16.msra.mxu0 0
      %1116 = vmatpush.bf16.msra.mxu0 0
      %1117 = vmatpush.bf16.msra.mxu0 %v1001
      %1118 = vmatpush.bf16.msra.mxu0 %v1000
      %1119 = vmatpush.bf16.msra.mxu0 %v999
      %1120 = vmatpush.bf16.msra.mxu0 %v998
      %1121 = vmatmul.bf16.gmra.mxu0 %v1102
      %v1122 = vpop.f32.mrf.mxu0
      %v1123 = vadd.f32 0.0, %v1122
      %v1124 = vpop.f32.mrf.mxu0
      %v1125 = vadd.f32 0.0, %v1124
      %1126 = vmatmul.bf16.gmra.mxu0 %v1105
      %v1127 = vpop.f32.mrf.mxu0
      %v1128 = vadd.f32 0.0, %v1127
      %v1129 = vpop.f32.mrf.mxu0
      %v1130 = vadd.f32 0.0, %v1129
      %1131 = vmatmul.bf16.gmra.mxu0 %v1108
      %v1132 = vpop.f32.mrf.mxu0
      %v1133 = vadd.f32 0.0, %v1132
      %v1134 = vpop.f32.mrf.mxu0
      %v1135 = vadd.f32 0.0, %v1134
      %1136 = vmatmul.bf16.gmra.mxu0 %v1111
      %v1137 = vpop.f32.mrf.mxu0
      %v1138 = vadd.f32 0.0, %v1137
      %v1139 = vpop.f32.mrf.mxu0
      %v1140 = vadd.f32 0.0, %v1139
      %1141 = vdwg.mxu0
      %s1142 = scalar_lea.vmem %s5, 8
      %v1143 = vld [vmem:[%s1142] sm:$0xff]
      %vm1144 = vcmask 64512
      %v1146 = vsel %vm1144, %v1123, 0
      %v1149 = vsel %vm1144, %v1125, 0
      %v1152 = vsel %vm1144, %v1128, 0
      %v1155 = vsel %vm1144, %v1130, 0
      %v1158 = vsel %vm1144, %v1133, 0
      %v1161 = vsel %vm1144, %v1135, 0
      %v1164 = vsel %vm1144, %v1138, 0
      %v1167 = vsel %vm1144, %v1140, 0
      %1169 = vmatpush.msra.mxu0 0.0
      %1170 = vmatpush.msra.mxu0 0.0
      %1171 = vmatpush.msra.mxu0 0.0
      %1172 = vmatpush.msra.mxu0 0.0
      %1173 = vmatpush.msra.mxu0 0.0
      %1174 = vmatpush.msra.mxu0 0.0
      %1175 = vmatpush.msra.mxu0 0.0
      %1176 = vmatpush.msra.mxu0 0.0
      %1177 = vmatpush.msra.mxu0 0.0
      %1178 = vmatpush.msra.mxu0 0.0
      %1179 = vmatpush.msra.mxu0 0.0
      %1180 = vmatpush.msra.mxu0 0.0
      %1181 = vmatpush.msra.mxu0 0.0
      %1182 = vmatpush.msra.mxu0 0.0
      %1183 = vmatpush.msra.mxu0 0.0
      %1184 = vmatpush.msra.mxu0 %v1143
      %1185 = vmatmul.f32.gmra.mxu0 %v1146
      %v1186 = vpop.f32.mrf.mxu0
      %v1187 = vadd.f32 0.0, %v1186
      %1188 = vmatmul.f32.gmra.mxu0 %v1149
      %v1189 = vpop.f32.mrf.mxu0
      %v1190 = vadd.f32 0.0, %v1189
      %1191 = vmatmul.f32.gmra.mxu0 %v1152
      %v1192 = vpop.f32.mrf.mxu0
      %v1193 = vadd.f32 0.0, %v1192
      %1194 = vmatmul.f32.gmra.mxu0 %v1155
      %v1195 = vpop.f32.mrf.mxu0
      %v1196 = vadd.f32 0.0, %v1195
      %1197 = vmatmul.f32.gmra.mxu0 %v1158
      %v1198 = vpop.f32.mrf.mxu0
      %v1199 = vadd.f32 0.0, %v1198
      %1200 = vmatmul.f32.gmra.mxu0 %v1161
      %v1201 = vpop.f32.mrf.mxu0
      %v1202 = vadd.f32 0.0, %v1201
      %1203 = vmatmul.f32.gmra.mxu0 %v1164
      %v1204 = vpop.f32.mrf.mxu0
      %v1205 = vadd.f32 0.0, %v1204
      %1206 = vmatmul.f32.gmra.mxu0 %v1167
      %v1207 = vpop.f32.mrf.mxu0
      %v1208 = vadd.f32 0.0, %v1207
      %1209 = vdwg.mxu0
      %v1211 = vsel %vm1144, %v1052, 0
      %v1214 = vsel %vm1144, %v1054, 0
      %v1217 = vsel %vm1144, %v1057, 0
      %v1220 = vsel %vm1144, %v1059, 0
      %v1223 = vsel %vm1144, %v1062, 0
      %v1226 = vsel %vm1144, %v1064, 0
      %v1229 = vsel %vm1144, %v1067, 0
      %v1232 = vsel %vm1144, %v1069, 0
      %1234 = vmatpush.msra.mxu0 0.0
      %1235 = vmatpush.msra.mxu0 0.0
      %1236 = vmatpush.msra.mxu0 0.0
      %1237 = vmatpush.msra.mxu0 0.0
      %1238 = vmatpush.msra.mxu0 0.0
      %1239 = vmatpush.msra.mxu0 0.0
      %1240 = vmatpush.msra.mxu0 0.0
      %1241 = vmatpush.msra.mxu0 0.0
      %1242 = vmatpush.msra.mxu0 0.0
      %1243 = vmatpush.msra.mxu0 0.0
      %1244 = vmatpush.msra.mxu0 0.0
      %1245 = vmatpush.msra.mxu0 0.0
      %1246 = vmatpush.msra.mxu0 0.0
      %1247 = vmatpush.msra.mxu0 0.0
      %1248 = vmatpush.msra.mxu0 0.0
      %1249 = vmatpush.msra.mxu0 %v1071
      %1250 = vmatmul.f32.gmra.mxu0 %v1211
      %v1251 = vpop.f32.mrf.mxu0
      %v1252 = vadd.f32 %v1187, %v1251
      %1253 = vmatmul.f32.gmra.mxu0 %v1214
      %v1254 = vpop.f32.mrf.mxu0
      %v1255 = vadd.f32 %v1190, %v1254
      %1256 = vmatmul.f32.gmra.mxu0 %v1217
      %v1257 = vpop.f32.mrf.mxu0
      %v1258 = vadd.f32 %v1193, %v1257
      %1259 = vmatmul.f32.gmra.mxu0 %v1220
      %v1260 = vpop.f32.mrf.mxu0
      %v1261 = vadd.f32 %v1196, %v1260
      %1262 = vmatmul.f32.gmra.mxu0 %v1223
      %v1263 = vpop.f32.mrf.mxu0
      %v1264 = vadd.f32 %v1199, %v1263
      %1265 = vmatmul.f32.gmra.mxu0 %v1226
      %v1266 = vpop.f32.mrf.mxu0
      %v1267 = vadd.f32 %v1202, %v1266
      %1268 = vmatmul.f32.gmra.mxu0 %v1229
      %v1269 = vpop.f32.mrf.mxu0
      %v1270 = vadd.f32 %v1205, %v1269
      %1271 = vmatmul.f32.gmra.mxu0 %v1232
      %v1272 = vpop.f32.mrf.mxu0
      %v1273 = vadd.f32 %v1208, %v1272
      %1274 = vdwg.mxu0
      %s1275 = scalar_lea.vmem %s4, 64
      %v1276 = vld [vmem:[%s1275] sm:$0xf]
      %v1277 = vld [vmem:[%s1275 + $0x4] sm:$0xf]
      %v1278 = vld [vmem:[%s1275 + $0x8] sm:$0xf]
      %v1279 = vld [vmem:[%s1275 + $0xc] sm:$0xf]
      %v1280 = vld [vmem:[%s1275 + $0x10] sm:$0xf]
      %v1281 = vld [vmem:[%s1275 + $0x14] sm:$0xf]
      %v1282 = vld [vmem:[%s1275 + $0x18] sm:$0xf]
      %v1283 = vld [vmem:[%s1275 + $0x1c] sm:$0xf]
      %v1292 = vunpack.c.l.b16 %v1276
      %v1293 = vunpack.c.l.b16 %v1277
      %v1294 = vunpack.c.l.b16 %v1278
      %v1295 = vunpack.c.l.b16 %v1279
      %v1296 = vunpack.c.l.b16 %v1280
      %v1297 = vunpack.c.l.b16 %v1281
      %v1298 = vunpack.c.l.b16 %v1282
      %v1299 = vunpack.c.l.b16 %v1283
      %v1300 = vpack.c.b16 %v1293, %v1292
      %v1301 = vpack.c.b16 %v1295, %v1294
      %v1302 = vpack.c.b16 %v1297, %v1296
      %v1303 = vpack.c.b16 %v1299, %v1298
      %v1305 = vsel %vm394, %v1300, 0
      %v1308 = vsel %vm394, %v1301, 0
      %v1311 = vsel %vm394, %v1302, 0
      %v1314 = vsel %vm394, %v1303, 0
      %1316 = vmatpush.bf16.msra.mxu0 0
      %1317 = vmatpush.bf16.msra.mxu0 0
      %1318 = vmatpush.bf16.msra.mxu0 0
      %1319 = vmatpush.bf16.msra.mxu0 0
      %1320 = vmatpush.bf16.msra.mxu0 %v1001
      %1321 = vmatpush.bf16.msra.mxu0 %v1000
      %1322 = vmatpush.bf16.msra.mxu0 %v999
      %1323 = vmatpush.bf16.msra.mxu0 %v998
      %1324 = vmatmul.bf16.gmra.mxu0 %v1305
      %v1325 = vpop.f32.mrf.mxu0
      %v1326 = vadd.f32 0.0, %v1325
      %v1327 = vpop.f32.mrf.mxu0
      %v1328 = vadd.f32 0.0, %v1327
      %1329 = vmatmul.bf16.gmra.mxu0 %v1308
      %v1330 = vpop.f32.mrf.mxu0
      %v1331 = vadd.f32 0.0, %v1330
      %v1332 = vpop.f32.mrf.mxu0
      %v1333 = vadd.f32 0.0, %v1332
      %1334 = vmatmul.bf16.gmra.mxu0 %v1311
      %v1335 = vpop.f32.mrf.mxu0
      %v1336 = vadd.f32 0.0, %v1335
      %v1337 = vpop.f32.mrf.mxu0
      %v1338 = vadd.f32 0.0, %v1337
      %1339 = vmatmul.bf16.gmra.mxu0 %v1314
      %v1340 = vpop.f32.mrf.mxu0
      %v1341 = vadd.f32 0.0, %v1340
      %v1342 = vpop.f32.mrf.mxu0
      %v1343 = vadd.f32 0.0, %v1342
      %1344 = vdwg.mxu0
      %s1345 = scalar_lea.vmem %s5, 16
      %v1346 = vld [vmem:[%s1345] sm:$0xff]
      %v1348 = vsel %vm1144, %v1326, 0
      %v1351 = vsel %vm1144, %v1328, 0
      %v1354 = vsel %vm1144, %v1331, 0
      %v1357 = vsel %vm1144, %v1333, 0
      %v1360 = vsel %vm1144, %v1336, 0
      %v1363 = vsel %vm1144, %v1338, 0
      %v1366 = vsel %vm1144, %v1341, 0
      %v1369 = vsel %vm1144, %v1343, 0
      %1371 = vmatpush.msra.mxu0 0.0
      %1372 = vmatpush.msra.mxu0 0.0
      %1373 = vmatpush.msra.mxu0 0.0
      %1374 = vmatpush.msra.mxu0 0.0
      %1375 = vmatpush.msra.mxu0 0.0
      %1376 = vmatpush.msra.mxu0 0.0
      %1377 = vmatpush.msra.mxu0 0.0
      %1378 = vmatpush.msra.mxu0 0.0
      %1379 = vmatpush.msra.mxu0 0.0
      %1380 = vmatpush.msra.mxu0 0.0
      %1381 = vmatpush.msra.mxu0 0.0
      %1382 = vmatpush.msra.mxu0 0.0
      %1383 = vmatpush.msra.mxu0 0.0
      %1384 = vmatpush.msra.mxu0 0.0
      %1385 = vmatpush.msra.mxu0 0.0
      %1386 = vmatpush.msra.mxu0 %v1346
      %1387 = vmatmul.f32.gmra.mxu0 %v1348
      %v1388 = vpop.f32.mrf.mxu0
      %v1389 = vadd.f32 0.0, %v1388
      %1390 = vmatmul.f32.gmra.mxu0 %v1351
      %v1391 = vpop.f32.mrf.mxu0
      %v1392 = vadd.f32 0.0, %v1391
      %1393 = vmatmul.f32.gmra.mxu0 %v1354
      %v1394 = vpop.f32.mrf.mxu0
      %v1395 = vadd.f32 0.0, %v1394
      %1396 = vmatmul.f32.gmra.mxu0 %v1357
      %v1397 = vpop.f32.mrf.mxu0
      %v1398 = vadd.f32 0.0, %v1397
      %1399 = vmatmul.f32.gmra.mxu0 %v1360
      %v1400 = vpop.f32.mrf.mxu0
      %v1401 = vadd.f32 0.0, %v1400
      %1402 = vmatmul.f32.gmra.mxu0 %v1363
      %v1403 = vpop.f32.mrf.mxu0
      %v1404 = vadd.f32 0.0, %v1403
      %1405 = vmatmul.f32.gmra.mxu0 %v1366
      %v1406 = vpop.f32.mrf.mxu0
      %v1407 = vadd.f32 0.0, %v1406
      %1408 = vmatmul.f32.gmra.mxu0 %v1369
      %v1409 = vpop.f32.mrf.mxu0
      %v1410 = vadd.f32 0.0, %v1409
      %1411 = vdwg.mxu0
      %v1412 = vadd.f32 %v1252, %v1389
      %v1413 = vadd.f32 %v1255, %v1392
      %v1414 = vadd.f32 %v1258, %v1395
      %v1415 = vadd.f32 %v1261, %v1398
      %v1416 = vadd.f32 %v1264, %v1401
      %v1417 = vadd.f32 %v1267, %v1404
      %v1418 = vadd.f32 %v1270, %v1407
      %v1419 = vadd.f32 %v1273, %v1410
      %s1420 = scalar_lea.vmem %s4, 96
      %v1421 = vld [vmem:[%s1420] sm:$0xf]
      %v1422 = vld [vmem:[%s1420 + $0x4] sm:$0xf]
      %v1423 = vld [vmem:[%s1420 + $0x8] sm:$0xf]
      %v1424 = vld [vmem:[%s1420 + $0xc] sm:$0xf]
      %v1425 = vld [vmem:[%s1420 + $0x10] sm:$0xf]
      %v1426 = vld [vmem:[%s1420 + $0x14] sm:$0xf]
      %v1427 = vld [vmem:[%s1420 + $0x18] sm:$0xf]
      %v1428 = vld [vmem:[%s1420 + $0x1c] sm:$0xf]
      %v1437 = vunpack.c.l.b16 %v1421
      %v1438 = vunpack.c.l.b16 %v1422
      %v1439 = vunpack.c.l.b16 %v1423
      %v1440 = vunpack.c.l.b16 %v1424
      %v1441 = vunpack.c.l.b16 %v1425
      %v1442 = vunpack.c.l.b16 %v1426
      %v1443 = vunpack.c.l.b16 %v1427
      %v1444 = vunpack.c.l.b16 %v1428
      %v1445 = vpack.c.b16 %v1438, %v1437
      %v1446 = vpack.c.b16 %v1440, %v1439
      %v1447 = vpack.c.b16 %v1442, %v1441
      %v1448 = vpack.c.b16 %v1444, %v1443
      %v1450 = vsel %vm394, %v1445, 0
      %v1453 = vsel %vm394, %v1446, 0
      %v1456 = vsel %vm394, %v1447, 0
      %v1459 = vsel %vm394, %v1448, 0
      %1461 = vmatpush.bf16.msra.mxu0 0
      %1462 = vmatpush.bf16.msra.mxu0 0
      %1463 = vmatpush.bf16.msra.mxu0 0
      %1464 = vmatpush.bf16.msra.mxu0 0
      %1465 = vmatpush.bf16.msra.mxu0 %v1001
      %1466 = vmatpush.bf16.msra.mxu0 %v1000
      %1467 = vmatpush.bf16.msra.mxu0 %v999
      %1468 = vmatpush.bf16.msra.mxu0 %v998
      %1469 = vmatmul.bf16.gmra.mxu0 %v1450
      %v1470 = vpop.f32.mrf.mxu0
      %v1471 = vadd.f32 0.0, %v1470
      %v1472 = vpop.f32.mrf.mxu0
      %v1473 = vadd.f32 0.0, %v1472
      %1474 = vmatmul.bf16.gmra.mxu0 %v1453
      %v1475 = vpop.f32.mrf.mxu0
      %v1476 = vadd.f32 0.0, %v1475
      %v1477 = vpop.f32.mrf.mxu0
      %v1478 = vadd.f32 0.0, %v1477
      %1479 = vmatmul.bf16.gmra.mxu0 %v1456
      %v1480 = vpop.f32.mrf.mxu0
      %v1481 = vadd.f32 0.0, %v1480
      %v1482 = vpop.f32.mrf.mxu0
      %v1483 = vadd.f32 0.0, %v1482
      %1484 = vmatmul.bf16.gmra.mxu0 %v1459
      %v1485 = vpop.f32.mrf.mxu0
      %v1486 = vadd.f32 0.0, %v1485
      %v1487 = vpop.f32.mrf.mxu0
      %v1488 = vadd.f32 0.0, %v1487
      %1489 = vdwg.mxu0
      %s1490 = scalar_lea.vmem %s5, 24
      %v1491 = vld [vmem:[%s1490] sm:$0xff]
      %v1493 = vsel %vm1144, %v1471, 0
      %v1496 = vsel %vm1144, %v1473, 0
      %v1499 = vsel %vm1144, %v1476, 0
      %v1502 = vsel %vm1144, %v1478, 0
      %v1505 = vsel %vm1144, %v1481, 0
      %v1508 = vsel %vm1144, %v1483, 0
      %v1511 = vsel %vm1144, %v1486, 0
      %v1514 = vsel %vm1144, %v1488, 0
      %1516 = vmatpush.msra.mxu0 0.0
      %1517 = vmatpush.msra.mxu0 0.0
      %1518 = vmatpush.msra.mxu0 0.0
      %1519 = vmatpush.msra.mxu0 0.0
      %1520 = vmatpush.msra.mxu0 0.0
      %1521 = vmatpush.msra.mxu0 0.0
      %1522 = vmatpush.msra.mxu0 0.0
      %1523 = vmatpush.msra.mxu0 0.0
      %1524 = vmatpush.msra.mxu0 0.0
      %1525 = vmatpush.msra.mxu0 0.0
      %1526 = vmatpush.msra.mxu0 0.0
      %1527 = vmatpush.msra.mxu0 0.0
      %1528 = vmatpush.msra.mxu0 0.0
      %1529 = vmatpush.msra.mxu0 0.0
      %1530 = vmatpush.msra.mxu0 0.0
      %1531 = vmatpush.msra.mxu0 %v1491
      %1532 = vmatmul.f32.gmra.mxu0 %v1493
      %v1533 = vpop.f32.mrf.mxu0
      %v1534 = vadd.f32 0.0, %v1533
      %1535 = vmatmul.f32.gmra.mxu0 %v1496
      %v1536 = vpop.f32.mrf.mxu0
      %v1537 = vadd.f32 0.0, %v1536
      %1538 = vmatmul.f32.gmra.mxu0 %v1499
      %v1539 = vpop.f32.mrf.mxu0
      %v1540 = vadd.f32 0.0, %v1539
      %1541 = vmatmul.f32.gmra.mxu0 %v1502
      %v1542 = vpop.f32.mrf.mxu0
      %v1543 = vadd.f32 0.0, %v1542
      %1544 = vmatmul.f32.gmra.mxu0 %v1505
      %v1545 = vpop.f32.mrf.mxu0
      %v1546 = vadd.f32 0.0, %v1545
      %1547 = vmatmul.f32.gmra.mxu0 %v1508
      %v1548 = vpop.f32.mrf.mxu0
      %v1549 = vadd.f32 0.0, %v1548
      %1550 = vmatmul.f32.gmra.mxu0 %v1511
      %v1551 = vpop.f32.mrf.mxu0
      %v1552 = vadd.f32 0.0, %v1551
      %1553 = vmatmul.f32.gmra.mxu0 %v1514
      %v1554 = vpop.f32.mrf.mxu0
      %v1555 = vadd.f32 0.0, %v1554
      %1556 = vdwg.mxu0
      %v1557 = vadd.f32 %v1412, %v1534
      %v1558 = vadd.f32 %v1413, %v1537
      %v1559 = vadd.f32 %v1414, %v1540
      %v1560 = vadd.f32 %v1415, %v1543
      %v1561 = vadd.f32 %v1416, %v1546
      %v1562 = vadd.f32 %v1417, %v1549
      %v1563 = vadd.f32 %v1418, %v1552
      %v1564 = vadd.f32 %v1419, %v1555
      %v1565 = vld [vmem:[%s6] sm:$0xff]
      %v1566 = vld [vmem:[%s6 + $0x8] sm:$0xff]
      %v1567 = vld [vmem:[%s6 + $0x10] sm:$0xff]
      %v1568 = vld [vmem:[%s6 + $0x18] sm:$0xff]
      %v1569 = vld [vmem:[%s6 + $0x20] sm:$0xff]
      %v1570 = vld [vmem:[%s6 + $0x28] sm:$0xff]
      %v1571 = vld [vmem:[%s6 + $0x30] sm:$0xff]
      %v1572 = vld [vmem:[%s6 + $0x38] sm:$0xff]
      %1574 = vset.pattern.permute.xlu0 0
      %1575 = vperm.xlu0 %1574, %v1565
      %v1576 = vpop.permute.xlu0 %1575
      %1579 = vset.pattern.permute.xlu0 0
      %1580 = vperm.xlu0 %1579, %v1566
      %v1581 = vpop.permute.xlu0 %1580
      %1584 = vset.pattern.permute.xlu0 0
      %1585 = vperm.xlu0 %1584, %v1567
      %v1586 = vpop.permute.xlu0 %1585
      %1589 = vset.pattern.permute.xlu0 0
      %1590 = vperm.xlu0 %1589, %v1568
      %v1591 = vpop.permute.xlu0 %1590
      %1594 = vset.pattern.permute.xlu0 0
      %1595 = vperm.xlu0 %1594, %v1569
      %v1596 = vpop.permute.xlu0 %1595
      %1599 = vset.pattern.permute.xlu0 0
      %1600 = vperm.xlu0 %1599, %v1570
      %v1601 = vpop.permute.xlu0 %1600
      %1604 = vset.pattern.permute.xlu0 0
      %1605 = vperm.xlu0 %1604, %v1571
      %v1606 = vpop.permute.xlu0 %1605
      %1609 = vset.pattern.permute.xlu0 0
      %1610 = vperm.xlu0 %1609, %v1572
      %v1611 = vpop.permute.xlu0 %1610
      %v1613 = vadd.f32 %v1557, %v1576
      %v1614 = vadd.f32 %v1558, %v1581
      %v1615 = vadd.f32 %v1559, %v1586
      %v1616 = vadd.f32 %v1560, %v1591
      %v1617 = vadd.f32 %v1561, %v1596
      %v1618 = vadd.f32 %v1562, %v1601
      %v1619 = vadd.f32 %v1563, %v1606
      %v1620 = vadd.f32 %v1564, %v1611
      %v1621 = vmax.f32 %v1613, 0.0
      %v1622 = vmax.f32 %v1614, 0.0
      %v1623 = vmax.f32 %v1615, 0.0
      %v1624 = vmax.f32 %v1616, 0.0
      %v1625 = vmax.f32 %v1617, 0.0
      %v1626 = vmax.f32 %v1618, 0.0
      %v1627 = vmax.f32 %v1619, 0.0
      %v1628 = vmax.f32 %v1620, 0.0
      %v1629 = vpack.c.bf16 %v1622, %v1621
      %v1630 = vpack.c.bf16 %v1624, %v1623
      %v1631 = vpack.c.bf16 %v1626, %v1625
      %v1632 = vpack.c.bf16 %v1628, %v1627
      %v1633 = vld [vmem:[%s7] sm:$0xf]
      %v1634 = vld [vmem:[%s7 + $0x4] sm:$0xf]
      %v1635 = vld [vmem:[%s7 + $0x8] sm:$0xf]
      %v1636 = vld [vmem:[%s7 + $0xc] sm:$0xf]
      %v1637 = vld [vmem:[%s7 + $0x10] sm:$0xf]
      %v1638 = vld [vmem:[%s7 + $0x14] sm:$0xf]
      %v1639 = vld [vmem:[%s7 + $0x18] sm:$0xf]
      %v1640 = vld [vmem:[%s7 + $0x1c] sm:$0xf]
      %v1641 = vld [vmem:[%s8] sm:$0xff]
      %v1642 = vld [vmem:[%s8 + $0x8] sm:$0xff]
      %v1643 = vld [vmem:[%s8 + $0x10] sm:$0xff]
      %v1644 = vld [vmem:[%s8 + $0x18] sm:$0xff]
      %v1645 = vld [vmem:[%s8 + $0x20] sm:$0xff]
      %v1646 = vld [vmem:[%s8 + $0x28] sm:$0xff]
      %v1647 = vld [vmem:[%s8 + $0x30] sm:$0xff]
      %v1648 = vld [vmem:[%s8 + $0x38] sm:$0xff]
      %1650 = vset.pattern.permute.xlu0 0
      %1651 = vperm.xlu0 %1650, %v1641
      %v1652 = vpop.permute.xlu0 %1651
      %1655 = vset.pattern.permute.xlu0 0
      %1656 = vperm.xlu0 %1655, %v1642
      %v1657 = vpop.permute.xlu0 %1656
      %1660 = vset.pattern.permute.xlu0 0
      %1661 = vperm.xlu0 %1660, %v1643
      %v1662 = vpop.permute.xlu0 %1661
      %1665 = vset.pattern.permute.xlu0 0
      %1666 = vperm.xlu0 %1665, %v1644
      %v1667 = vpop.permute.xlu0 %1666
      %1670 = vset.pattern.permute.xlu0 0
      %1671 = vperm.xlu0 %1670, %v1645
      %v1672 = vpop.permute.xlu0 %1671
      %1675 = vset.pattern.permute.xlu0 0
      %1676 = vperm.xlu0 %1675, %v1646
      %v1677 = vpop.permute.xlu0 %1676
      %1680 = vset.pattern.permute.xlu0 0
      %1681 = vperm.xlu0 %1680, %v1647
      %v1682 = vpop.permute.xlu0 %1681
      %1685 = vset.pattern.permute.xlu0 0
      %1686 = vperm.xlu0 %1685, %v1648
      %v1687 = vpop.permute.xlu0 %1686
      %v1697 = vunpack.c.l.b16 %v1633
      %v1698 = vunpack.c.l.b16 %v1634
      %v1699 = vunpack.c.l.b16 %v1635
      %v1700 = vunpack.c.l.b16 %v1636
      %v1701 = vunpack.c.l.b16 %v1637
      %v1702 = vunpack.c.l.b16 %v1638
      %v1703 = vunpack.c.l.b16 %v1639
      %v1704 = vunpack.c.l.b16 %v1640
      %v1705 = vpack.c.b16 %v1698, %v1697
      %v1706 = vpack.c.b16 %v1700, %v1699
      %v1707 = vpack.c.b16 %v1702, %v1701
      %v1708 = vpack.c.b16 %v1704, %v1703
      %v1710 = vsel %vm394, %v1705, 0
      %v1713 = vsel %vm394, %v1706, 0
      %v1716 = vsel %vm394, %v1707, 0
      %v1719 = vsel %vm394, %v1708, 0
      %1721 = vmatpush.bf16.msra.mxu0 0
      %1722 = vmatpush.bf16.msra.mxu0 0
      %1723 = vmatpush.bf16.msra.mxu0 0
      %1724 = vmatpush.bf16.msra.mxu0 0
      %1725 = vmatpush.bf16.msra.mxu0 %v1632
      %1726 = vmatpush.bf16.msra.mxu0 %v1631
      %1727 = vmatpush.bf16.msra.mxu0 %v1630
      %1728 = vmatpush.bf16.msra.mxu0 %v1629
      %1729 = vmatmul.bf16.gmra.mxu0 %v1710
      %v1730 = vpop.f32.mrf.mxu0
      %v1731 = vadd.f32 %v1652, %v1730
      %v1732 = vpop.f32.mrf.mxu0
      %v1733 = vadd.f32 %v1657, %v1732
      %1734 = vmatmul.bf16.gmra.mxu0 %v1713
      %v1735 = vpop.f32.mrf.mxu0
      %v1736 = vadd.f32 %v1662, %v1735
      %v1737 = vpop.f32.mrf.mxu0
      %v1738 = vadd.f32 %v1667, %v1737
      %1739 = vmatmul.bf16.gmra.mxu0 %v1716
      %v1740 = vpop.f32.mrf.mxu0
      %v1741 = vadd.f32 %v1672, %v1740
      %v1742 = vpop.f32.mrf.mxu0
      %v1743 = vadd.f32 %v1677, %v1742
      %1744 = vmatmul.bf16.gmra.mxu0 %v1719
      %v1745 = vpop.f32.mrf.mxu0
      %v1746 = vadd.f32 %v1682, %v1745
      %v1747 = vpop.f32.mrf.mxu0
      %v1748 = vadd.f32 %v1687, %v1747
      %1749 = vdwg.mxu0
      %vm1750 = vcmask 31744
      %1751 = vst.msk [vmem:[%s332] sm:$0xff] %vm1750, %v1731
      %1752 = vst.msk [vmem:[%s332 + $0x8] sm:$0xff] %vm1750, %v1733
      %1753 = vst.msk [vmem:[%s332 + $0x10] sm:$0xff] %vm1750, %v1736
      %1754 = vst.msk [vmem:[%s332 + $0x18] sm:$0xff] %vm1750, %v1738
      %1755 = vst.msk [vmem:[%s332 + $0x20] sm:$0xff] %vm1750, %v1741
      %1756 = vst.msk [vmem:[%s332 + $0x28] sm:$0xff] %vm1750, %v1743
      %1757 = vst.msk [vmem:[%s332 + $0x30] sm:$0xff] %vm1750, %v1746
      %1758 = vst.msk [vmem:[%s332 + $0x38] sm:$0xff] %vm1750, %v1748
      %p1759 = scmp.lt.s32.totalorder %s20, 1
      %s1760 = scalar_select %p1759, %s20, 1
      %s1761 = smul.addr %s1760, 8
      %s1762 = smul.addr %s1761, 8
      %s1763 = scalar_lea.vmem %s9, %s1762
      // Predicated region
      $region57: #{forward.1} parent=55 // pred_check
        %p1764 = pneg %p232
      $region58: #{forward.1} parent=55 // pred_check_branch
        %1766 = sbr.rel (%p1764) target = $region60
      $region59: #{forward.1} parent=55 // pred_region
        _
      $region60: #{forward.1} parent=55 // pred_fallthru
        _
    $region56: #{forward.1} parent=5 // pred_fallthru
      _
    %p1767 = scmp.le.s32.totalorder 2, %s15
    // Predicated region
    $region61: #{forward.1} parent=5 // pred_check
      %p1768 = pneg %p1767
    $region62: #{forward.1} parent=5 // pred_check_branch
      %1770 = sbr.rel (%p1768) target = $region64
    $region63: #{forward.1} parent=5 // pred_region
      %s1771 = ssub.s32 %s15, 2
      // Predicated region
      $region65: #{forward.1} parent=63 // pred_check
        %p1772 = pneg %p238
      $region66: #{forward.1} parent=63 // pred_check_branch
        %1774 = sbr.rel (%p1772) target = $region68
      $region67: #{forward.1} parent=63 // pred_region
        %p1775 = scmp.lt.s32.totalorder %s21, 1
        %s1776 = scalar_select %p1775, %s21, 1
        %s1777 = smul.addr %s1776, 8
        %s1778 = smul.addr %s1777, 8
        %s1779 = scalar_lea.vmem %s9, %s1778
      $region68: #{forward.1} parent=63 // pred_fallthru
        _
    $region64: #{forward.1} parent=5 // pred_fallthru
      _
  $region6: #{forward.1} parent=0 // loop_footer
    %s19 = sadd.s32 1, %s15
  $region7: #{forward.1} parent=0 // loop_footer_branch
    %14 = sbr.rel target = $region3
  $region8: #{forward.1} parent=0 // loop_exit
    _

</llo_original>
